<compile_context>
chip_gen: v7x
topology: tpu7x:2x2x1
jax: 0.10.0
libtpu: 0.0.40
codegen_flags: <defaults>
</compile_context>

<pallas_src>
import functools

import jax
import jax.numpy as jnp
from jax import lax
from jax.experimental import pallas as pl
from jax.experimental.pallas import tpu as pltpu


def _make_kernel(num_layers, B, T, H, mm_dtype):
    def kernel(*refs):
        # refs: x(TB,I), (wih_l, whh_l, b_l) * num_layers, wfc(1,H), bfc(1,1),
        #       out(B,1), seq_scratch(TB,H), gates_scratch(TB,4H)
        x_ref = refs[0]
        layer_refs = []
        idx = 1
        for _ in range(num_layers):
            layer_refs.append((refs[idx], refs[idx + 1], refs[idx + 2]))
            idx += 3
        wfc_ref, bfc_ref = refs[idx], refs[idx + 1]
        out_ref = refs[idx + 2]
        seq_ref = refs[idx + 3]    # (T*B, H)  current layer's output sequence (time-major rows)
        gates_ref = refs[idx + 4]  # (T*B, 4H) hoisted input projection (+ bias) for current layer

        # --- stacked LSTM recurrence (dropout=0.0, unidirectional) ---
        for l in range(num_layers):
            wih_ref, whh_ref, b_ref = layer_refs[l]
            wih = wih_ref[...].astype(mm_dtype)   # (in_dim, 4H)
            whh = whh_ref[...].astype(mm_dtype)   # (H, 4H)
            b = b_ref[...]                        # (1, 4H) == b_ih + b_hh (f32)

            # Hoisted input projection: one MXU matmul over all T*B rows.
            inp = x_ref[...] if l == 0 else seq_ref[...]     # (T*B, in_dim)
            gates_ref[...] = (
                jnp.dot(inp.astype(mm_dtype), wih,
                        preferred_element_type=jnp.float32) + b)

            # Fully-unrolled serial recurrence: only h @ W_hh stays on the
            # critical path.  State kept in f32.
            h = jnp.zeros((B, H), jnp.float32)
            c = jnp.zeros((B, H), jnp.float32)
            for t in range(T):
                g = gates_ref[t * B:(t + 1) * B, :] + jnp.dot(
                    h.astype(mm_dtype), whh, preferred_element_type=jnp.float32)
                # Two full-width EUP passes instead of four sliced ones.
                s = jax.nn.sigmoid(g)     # (B, 4H): i | f | . | o
                th = jnp.tanh(g)          # (B, 4H): . | . | g | .
                c = s[:, H:2 * H] * c + s[:, 0:H] * th[:, 2 * H:3 * H]
                h = s[:, 3 * H:4 * H] * jnp.tanh(c)
                seq_ref[t * B:(t + 1) * B, :] = h

        # --- fused epilogue: fc(hidden -> 1) + sigmoid + mean over (T, 1) ---
        # Output width is 1, so skip the MXU: VPU multiply + lane reduce.
        z = jnp.sum(seq_ref[...] * wfc_ref[...], axis=-1, keepdims=True)  # (T*B, 1)
        y = jax.nn.sigmoid(z + bfc_ref[...])                              # (T*B, 1)
        acc = y[0:B, :]
        for t in range(1, T):
            acc = acc + y[t * B:(t + 1) * B, :]
        out_ref[...] = acc * (1.0 / T)

    return kernel


def discriminator_forward(x, params, *, num_layers, hidden_size,
                          mm_dtype=jnp.float32):
    """x: (B, T, input_size) batch_first, like the PyTorch module. Returns (B,).

    Set mm_dtype=jnp.bfloat16 on v6e/v7x for ~2x MXU throughput (state and
    elementwise math stay f32)."""
    B, T, I = x.shape
    H = hidden_size
    # Time-major flatten (row index = t*B + b).  One tiny XLA-side transpose;
    # negligible at these shapes.  (At long T, fold this into a gridded
    # index_map / chunked DMA instead of an HBM pass.)
    x_tm = jnp.transpose(x, (1, 0, 2)).reshape(T * B, I).astype(jnp.float32)

    inputs = [x_tm]
    for l in range(num_layers):
        inputs += [params["wih"][l], params["whh"][l], params["b"][l]]
    inputs += [jnp.transpose(params["wfc"]), params["bfc"]]   # wfc as (1, H) row

    kernel = _make_kernel(num_layers, B, T, H, mm_dtype)
    out = pl.pallas_call(
        kernel,
        out_shape=jax.ShapeDtypeStruct((B, 1), jnp.float32),
        in_specs=[pl.BlockSpec(memory_space=pltpu.MemorySpace.VMEM)] * len(inputs),
        out_specs=pl.BlockSpec(memory_space=pltpu.MemorySpace.VMEM),
        scratch_shapes=[
            pltpu.VMEM((T * B, H), jnp.float32),       # layer output sequence
            pltpu.VMEM((T * B, 4 * H), jnp.float32),   # hoisted input projection
        ],
        compiler_params=pltpu.CompilerParams(
            vmem_limit_bytes=32 * 1024 * 1024),
    )(*inputs)
    return out[:, 0]


def init_params(key, input_size, hidden_size, num_layers):
    """Deterministic init matching torch.nn.LSTM / nn.Linear shapes (transposed)."""
    H = hidden_size
    bound = 1.0 / float(H) ** 0.5
    keys = jax.random.split(key, num_layers * 4 + 2)
    wih, whh, b = [], [], []
    ki = 0
    for l in range(num_layers):
        in_dim = input_size if l == 0 else H
        wih.append(jax.random.uniform(keys[ki], (in_dim, 4 * H), jnp.float32,
                                      -bound, bound)); ki += 1
        whh.append(jax.random.uniform(keys[ki], (H, 4 * H), jnp.float32,
                                      -bound, bound)); ki += 1
        b_ih = jax.random.uniform(keys[ki], (4 * H,), jnp.float32, -bound, bound); ki += 1
        b_hh = jax.random.uniform(keys[ki], (4 * H,), jnp.float32, -bound, bound); ki += 1
        b.append((b_ih + b_hh).reshape(1, 4 * H))
    wfc = jax.random.uniform(keys[ki], (H, 1), jnp.float32, -bound, bound); ki += 1
    bfc = jax.random.uniform(keys[ki], (1, 1), jnp.float32, -bound, bound)
    return {"wih": wih, "whh": whh, "b": b, "wfc": wfc, "bfc": bfc}


def reference_forward(x, params, *, num_layers, hidden_size):
    """Pure-JAX reference of the PyTorch forward (for correctness check)."""
    B, T, _ = x.shape
    H = hidden_size
    seq = x.astype(jnp.float32)
    for l in range(num_layers):
        wih, whh, b = params["wih"][l], params["whh"][l], params["b"][l]

        def step(carry, xt, wih=wih, whh=whh, b=b):
            h, c = carry
            gates = xt @ wih + h @ whh + b
            i = jax.nn.sigmoid(gates[:, :H])
            f = jax.nn.sigmoid(gates[:, H:2 * H])
            g = jnp.tanh(gates[:, 2 * H:3 * H])
            o = jax.nn.sigmoid(gates[:, 3 * H:])
            c = f * c + i * g
            h = o * jnp.tanh(c)
            return (h, c), h

        init = (jnp.zeros((B, H), jnp.float32), jnp.zeros((B, H), jnp.float32))
        _, hs = lax.scan(step, init, jnp.transpose(seq, (1, 0, 2)))
        seq = jnp.transpose(hs, (1, 0, 2))
    y = jax.nn.sigmoid(seq @ params["wfc"] + params["bfc"])   # (B, T, 1)
    return jnp.mean(y, axis=(1, 2))                           # mean over dims (1, 2)


if __name__ == "__main__":
    # Small shapes consistent with the module: batch=2, seq=8, input_size=4,
    # hidden_size=32, num_layers=2.
    B, T, I, H, L = 2, 8, 4, 32, 2
    key = jax.random.PRNGKey(0)
    k_x, k_p = jax.random.split(key)
    x = jax.random.normal(k_x, (B, T, I), jnp.float32)
    params = init_params(k_p, I, H, L)

    ref = reference_forward(x, params, num_layers=L, hidden_size=H)

    # f32 matmul operands (default): bitwise-comparable to the f32 reference.
    fwd = jax.jit(functools.partial(discriminator_forward,
                                    num_layers=L, hidden_size=H))
    out = fwd(x, params)
    jax.block_until_ready(out)
    assert out.shape == (B,)
    assert jnp.allclose(out, ref, atol=1e-4, rtol=1e-4), (out, ref)

    # bf16 matmul-operand path (the v6e/v7x throughput option): sanity check only,
    # since bf16 operands intentionally trade a little precision for MXU speed.
    fwd_bf16 = jax.jit(functools.partial(discriminator_forward,
                                         num_layers=L, hidden_size=H,
                                         mm_dtype=jnp.bfloat16))
    out_bf16 = fwd_bf16(x, params)
    jax.block_until_ready(out_bf16)
    assert out_bf16.shape == (B,)
    assert bool(jnp.all(jnp.isfinite(out_bf16)))
    assert jnp.allclose(out_bf16, ref, atol=1e-1, rtol=1e-1), (out_bf16, ref)

    print("KERNEL_OK")
</pallas_src>

<mosaic_0001>
module attributes {stable_mosaic.version = 11 : i64} {
  func.func @kernel(%arg0: memref<16x4xf32, #tpu.memory_space<vmem>>, %arg1: memref<4x128xf32, #tpu.memory_space<vmem>>, %arg2: memref<32x128xf32, #tpu.memory_space<vmem>>, %arg3: memref<1x128xf32, #tpu.memory_space<vmem>>, %arg4: memref<32x128xf32, #tpu.memory_space<vmem>>, %arg5: memref<32x128xf32, #tpu.memory_space<vmem>>, %arg6: memref<1x128xf32, #tpu.memory_space<vmem>>, %arg7: memref<1x32xf32, #tpu.memory_space<vmem>>, %arg8: memref<1x1xf32, #tpu.memory_space<vmem>>, %arg9: memref<2x1xf32, #tpu.memory_space<vmem>>, %arg10: memref<16x32xf32, #tpu.memory_space<vmem>>, %arg11: memref<16x128xf32, #tpu.memory_space<vmem>>) attributes {dimension_semantics = [], scalar_prefetch = 0 : i64, scratch_operands = 2 : i64, tpu.core_type = #tpu.core_type<tc>} {
    %c0 = arith.constant 0 : index
    %c0_0 = arith.constant 0 : index
    %0 = vector.load %arg1[%c0, %c0_0] : memref<4x128xf32, #tpu.memory_space<vmem>>, vector<4x128xf32>
    %c0_1 = arith.constant 0 : index
    %c0_2 = arith.constant 0 : index
    %1 = vector.load %arg2[%c0_1, %c0_2] : memref<32x128xf32, #tpu.memory_space<vmem>>, vector<32x128xf32>
    %c0_3 = arith.constant 0 : index
    %c0_4 = arith.constant 0 : index
    %2 = vector.load %arg3[%c0_3, %c0_4] : memref<1x128xf32, #tpu.memory_space<vmem>>, vector<1x128xf32>
    %c0_5 = arith.constant 0 : index
    %c0_6 = arith.constant 0 : index
    %3 = vector.load %arg0[%c0_5, %c0_6] : memref<16x4xf32, #tpu.memory_space<vmem>>, vector<16x4xf32>
    %cst = arith.constant dense<0.000000e+00> : vector<16x128xf32>
    %4 = tpu.matmul %3, %0, %cst {dimension_numbers = #tpu.dot_dimension_numbers<[1], [0], [0], [1], [0, 0, 1, 1], [], []>} : vector<16x4xf32>, vector<4x128xf32>, vector<16x128xf32> -> vector<16x128xf32>
    %5 = vector.broadcast %2 : vector<1x128xf32> to vector<16x128xf32>
    %6 = arith.addf %4, %5 : vector<16x128xf32>
    %c0_7 = arith.constant 0 : index
    %c0_8 = arith.constant 0 : index
    %7 = vector.load %arg11[%c0_7, %c0_8] : memref<16x128xf32, #tpu.memory_space<vmem>>, vector<16x128xf32>
    tpu.vector_store %arg11[%c0_7, %c0_8], %6 {strides = array<i32>} : memref<16x128xf32, #tpu.memory_space<vmem>>, vector<16x128xf32>,
    %cst_9 = arith.constant 0.000000e+00 : f32
    %8 = vector.broadcast %cst_9 : f32 to vector<2x32xf32>
    %cst_10 = arith.constant 0.000000e+00 : f32
    %9 = vector.broadcast %cst_10 : f32 to vector<2x32xf32>
    %c0_11 = arith.constant 0 : index
    %c0_12 = arith.constant 0 : index
    %10 = vector.load %arg11[%c0_11, %c0_12] : memref<16x128xf32, #tpu.memory_space<vmem>>, vector<2x128xf32>
    %cst_13 = arith.constant dense<0.000000e+00> : vector<2x128xf32>
    %11 = tpu.matmul %8, %1, %cst_13 {dimension_numbers = #tpu.dot_dimension_numbers<[1], [0], [0], [1], [0, 0, 1, 1], [], []>} : vector<2x32xf32>, vector<32x128xf32>, vector<2x128xf32> -> vector<2x128xf32>
    %12 = arith.addf %10, %11 : vector<2x128xf32>
    %13 = arith.negf %12 : vector<2x128xf32>
    %14 = math.exp %13 : vector<2x128xf32>
    %cst_14 = arith.constant 1.000000e+00 : f32
    %15 = vector.broadcast %cst_14 : f32 to vector<2x128xf32>
    %16 = arith.addf %15, %14 : vector<2x128xf32>
    %17 = arith.divf %15, %16 : vector<2x128xf32>
    %18 = math.tanh %12 : vector<2x128xf32>
    %19 = vector.extract_strided_slice %17 {offsets = [0, 32], sizes = [2, 32], strides = [1, 1]} : vector<2x128xf32> to vector<2x32xf32>
    %20 = arith.mulf %19, %9 : vector<2x32xf32>
    %21 = vector.extract_strided_slice %17 {offsets = [0, 0], sizes = [2, 32], strides = [1, 1]} : vector<2x128xf32> to vector<2x32xf32>
    %22 = vector.extract_strided_slice %18 {offsets = [0, 64], sizes = [2, 32], strides = [1, 1]} : vector<2x128xf32> to vector<2x32xf32>
    %23 = arith.mulf %21, %22 : vector<2x32xf32>
    %24 = arith.addf %20, %23 : vector<2x32xf32>
    %25 = vector.extract_strided_slice %17 {offsets = [0, 96], sizes = [2, 32], strides = [1, 1]} : vector<2x128xf32> to vector<2x32xf32>
    %26 = math.tanh %24 : vector<2x32xf32>
    %27 = arith.mulf %25, %26 : vector<2x32xf32>
    %c0_15 = arith.constant 0 : index
    %c0_16 = arith.constant 0 : index
    %28 = vector.load %arg10[%c0_15, %c0_16] : memref<16x32xf32, #tpu.memory_space<vmem>>, vector<2x32xf32>
    tpu.vector_store %arg10[%c0_15, %c0_16], %27 {strides = array<i32>} : memref<16x32xf32, #tpu.memory_space<vmem>>, vector<2x32xf32>,
    %c2 = arith.constant 2 : index
    %c0_17 = arith.constant 0 : index
    %29 = vector.load %arg11[%c2, %c0_17] : memref<16x128xf32, #tpu.memory_space<vmem>>, vector<2x128xf32>
    %cst_18 = arith.constant dense<0.000000e+00> : vector<2x128xf32>
    %30 = tpu.matmul %27, %1, %cst_18 {dimension_numbers = #tpu.dot_dimension_numbers<[1], [0], [0], [1], [0, 0, 1, 1], [], []>} : vector<2x32xf32>, vector<32x128xf32>, vector<2x128xf32> -> vector<2x128xf32>
    %31 = arith.addf %29, %30 : vector<2x128xf32>
    %32 = arith.negf %31 : vector<2x128xf32>
    %33 = math.exp %32 : vector<2x128xf32>
    %cst_19 = arith.constant 1.000000e+00 : f32
    %34 = vector.broadcast %cst_19 : f32 to vector<2x128xf32>
    %35 = arith.addf %34, %33 : vector<2x128xf32>
    %36 = arith.divf %34, %35 : vector<2x128xf32>
    %37 = math.tanh %31 : vector<2x128xf32>
    %38 = vector.extract_strided_slice %36 {offsets = [0, 32], sizes = [2, 32], strides = [1, 1]} : vector<2x128xf32> to vector<2x32xf32>
    %39 = arith.mulf %38, %24 : vector<2x32xf32>
    %40 = vector.extract_strided_slice %36 {offsets = [0, 0], sizes = [2, 32], strides = [1, 1]} : vector<2x128xf32> to vector<2x32xf32>
    %41 = vector.extract_strided_slice %37 {offsets = [0, 64], sizes = [2, 32], strides = [1, 1]} : vector<2x128xf32> to vector<2x32xf32>
    %42 = arith.mulf %40, %41 : vector<2x32xf32>
    %43 = arith.addf %39, %42 : vector<2x32xf32>
    %44 = vector.extract_strided_slice %36 {offsets = [0, 96], sizes = [2, 32], strides = [1, 1]} : vector<2x128xf32> to vector<2x32xf32>
    %45 = math.tanh %43 : vector<2x32xf32>
    %46 = arith.mulf %44, %45 : vector<2x32xf32>
    %c2_20 = arith.constant 2 : index
    %c0_21 = arith.constant 0 : index
    %47 = vector.load %arg10[%c2_20, %c0_21] : memref<16x32xf32, #tpu.memory_space<vmem>>, vector<2x32xf32>
    tpu.vector_store %arg10[%c2_20, %c0_21], %46 {strides = array<i32>} : memref<16x32xf32, #tpu.memory_space<vmem>>, vector<2x32xf32>,
    %c4 = arith.constant 4 : index
    %c0_22 = arith.constant 0 : index
    %48 = vector.load %arg11[%c4, %c0_22] : memref<16x128xf32, #tpu.memory_space<vmem>>, vector<2x128xf32>
    %cst_23 = arith.constant dense<0.000000e+00> : vector<2x128xf32>
    %49 = tpu.matmul %46, %1, %cst_23 {dimension_numbers = #tpu.dot_dimension_numbers<[1], [0], [0], [1], [0, 0, 1, 1], [], []>} : vector<2x32xf32>, vector<32x128xf32>, vector<2x128xf32> -> vector<2x128xf32>
    %50 = arith.addf %48, %49 : vector<2x128xf32>
    %51 = arith.negf %50 : vector<2x128xf32>
    %52 = math.exp %51 : vector<2x128xf32>
    %cst_24 = arith.constant 1.000000e+00 : f32
    %53 = vector.broadcast %cst_24 : f32 to vector<2x128xf32>
    %54 = arith.addf %53, %52 : vector<2x128xf32>
    %55 = arith.divf %53, %54 : vector<2x128xf32>
    %56 = math.tanh %50 : vector<2x128xf32>
    %57 = vector.extract_strided_slice %55 {offsets = [0, 32], sizes = [2, 32], strides = [1, 1]} : vector<2x128xf32> to vector<2x32xf32>
    %58 = arith.mulf %57, %43 : vector<2x32xf32>
    %59 = vector.extract_strided_slice %55 {offsets = [0, 0], sizes = [2, 32], strides = [1, 1]} : vector<2x128xf32> to vector<2x32xf32>
    %60 = vector.extract_strided_slice %56 {offsets = [0, 64], sizes = [2, 32], strides = [1, 1]} : vector<2x128xf32> to vector<2x32xf32>
    %61 = arith.mulf %59, %60 : vector<2x32xf32>
    %62 = arith.addf %58, %61 : vector<2x32xf32>
    %63 = vector.extract_strided_slice %55 {offsets = [0, 96], sizes = [2, 32], strides = [1, 1]} : vector<2x128xf32> to vector<2x32xf32>
    %64 = math.tanh %62 : vector<2x32xf32>
    %65 = arith.mulf %63, %64 : vector<2x32xf32>
    %c4_25 = arith.constant 4 : index
    %c0_26 = arith.constant 0 : index
    %66 = vector.load %arg10[%c4_25, %c0_26] : memref<16x32xf32, #tpu.memory_space<vmem>>, vector<2x32xf32>
    tpu.vector_store %arg10[%c4_25, %c0_26], %65 {strides = array<i32>} : memref<16x32xf32, #tpu.memory_space<vmem>>, vector<2x32xf32>,
    %c6 = arith.constant 6 : index
    %c0_27 = arith.constant 0 : index
    %67 = vector.load %arg11[%c6, %c0_27] : memref<16x128xf32, #tpu.memory_space<vmem>>, vector<2x128xf32>
    %cst_28 = arith.constant dense<0.000000e+00> : vector<2x128xf32>
    %68 = tpu.matmul %65, %1, %cst_28 {dimension_numbers = #tpu.dot_dimension_numbers<[1], [0], [0], [1], [0, 0, 1, 1], [], []>} : vector<2x32xf32>, vector<32x128xf32>, vector<2x128xf32> -> vector<2x128xf32>
    %69 = arith.addf %67, %68 : vector<2x128xf32>
    %70 = arith.negf %69 : vector<2x128xf32>
    %71 = math.exp %70 : vector<2x128xf32>
    %cst_29 = arith.constant 1.000000e+00 : f32
    %72 = vector.broadcast %cst_29 : f32 to vector<2x128xf32>
    %73 = arith.addf %72, %71 : vector<2x128xf32>
    %74 = arith.divf %72, %73 : vector<2x128xf32>
    %75 = math.tanh %69 : vector<2x128xf32>
    %76 = vector.extract_strided_slice %74 {offsets = [0, 32], sizes = [2, 32], strides = [1, 1]} : vector<2x128xf32> to vector<2x32xf32>
    %77 = arith.mulf %76, %62 : vector<2x32xf32>
    %78 = vector.extract_strided_slice %74 {offsets = [0, 0], sizes = [2, 32], strides = [1, 1]} : vector<2x128xf32> to vector<2x32xf32>
    %79 = vector.extract_strided_slice %75 {offsets = [0, 64], sizes = [2, 32], strides = [1, 1]} : vector<2x128xf32> to vector<2x32xf32>
    %80 = arith.mulf %78, %79 : vector<2x32xf32>
    %81 = arith.addf %77, %80 : vector<2x32xf32>
    %82 = vector.extract_strided_slice %74 {offsets = [0, 96], sizes = [2, 32], strides = [1, 1]} : vector<2x128xf32> to vector<2x32xf32>
    %83 = math.tanh %81 : vector<2x32xf32>
    %84 = arith.mulf %82, %83 : vector<2x32xf32>
    %c6_30 = arith.constant 6 : index
    %c0_31 = arith.constant 0 : index
    %85 = vector.load %arg10[%c6_30, %c0_31] : memref<16x32xf32, #tpu.memory_space<vmem>>, vector<2x32xf32>
    tpu.vector_store %arg10[%c6_30, %c0_31], %84 {strides = array<i32>} : memref<16x32xf32, #tpu.memory_space<vmem>>, vector<2x32xf32>,
    %c8 = arith.constant 8 : index
    %c0_32 = arith.constant 0 : index
    %86 = vector.load %arg11[%c8, %c0_32] : memref<16x128xf32, #tpu.memory_space<vmem>>, vector<2x128xf32>
    %cst_33 = arith.constant dense<0.000000e+00> : vector<2x128xf32>
    %87 = tpu.matmul %84, %1, %cst_33 {dimension_numbers = #tpu.dot_dimension_numbers<[1], [0], [0], [1], [0, 0, 1, 1], [], []>} : vector<2x32xf32>, vector<32x128xf32>, vector<2x128xf32> -> vector<2x128xf32>
    %88 = arith.addf %86, %87 : vector<2x128xf32>
    %89 = arith.negf %88 : vector<2x128xf32>
    %90 = math.exp %89 : vector<2x128xf32>
    %cst_34 = arith.constant 1.000000e+00 : f32
    %91 = vector.broadcast %cst_34 : f32 to vector<2x128xf32>
    %92 = arith.addf %91, %90 : vector<2x128xf32>
    %93 = arith.divf %91, %92 : vector<2x128xf32>
    %94 = math.tanh %88 : vector<2x128xf32>
    %95 = vector.extract_strided_slice %93 {offsets = [0, 32], sizes = [2, 32], strides = [1, 1]} : vector<2x128xf32> to vector<2x32xf32>
    %96 = arith.mulf %95, %81 : vector<2x32xf32>
    %97 = vector.extract_strided_slice %93 {offsets = [0, 0], sizes = [2, 32], strides = [1, 1]} : vector<2x128xf32> to vector<2x32xf32>
    %98 = vector.extract_strided_slice %94 {offsets = [0, 64], sizes = [2, 32], strides = [1, 1]} : vector<2x128xf32> to vector<2x32xf32>
    %99 = arith.mulf %97, %98 : vector<2x32xf32>
    %100 = arith.addf %96, %99 : vector<2x32xf32>
    %101 = vector.extract_strided_slice %93 {offsets = [0, 96], sizes = [2, 32], strides = [1, 1]} : vector<2x128xf32> to vector<2x32xf32>
    %102 = math.tanh %100 : vector<2x32xf32>
    %103 = arith.mulf %101, %102 : vector<2x32xf32>
    %c8_35 = arith.constant 8 : index
    %c0_36 = arith.constant 0 : index
    %104 = vector.load %arg10[%c8_35, %c0_36] : memref<16x32xf32, #tpu.memory_space<vmem>>, vector<2x32xf32>
    tpu.vector_store %arg10[%c8_35, %c0_36], %103 {strides = array<i32>} : memref<16x32xf32, #tpu.memory_space<vmem>>, vector<2x32xf32>,
    %c10 = arith.constant 10 : index
    %c0_37 = arith.constant 0 : index
    %105 = vector.load %arg11[%c10, %c0_37] : memref<16x128xf32, #tpu.memory_space<vmem>>, vector<2x128xf32>
    %cst_38 = arith.constant dense<0.000000e+00> : vector<2x128xf32>
    %106 = tpu.matmul %103, %1, %cst_38 {dimension_numbers = #tpu.dot_dimension_numbers<[1], [0], [0], [1], [0, 0, 1, 1], [], []>} : vector<2x32xf32>, vector<32x128xf32>, vector<2x128xf32> -> vector<2x128xf32>
    %107 = arith.addf %105, %106 : vector<2x128xf32>
    %108 = arith.negf %107 : vector<2x128xf32>
    %109 = math.exp %108 : vector<2x128xf32>
    %cst_39 = arith.constant 1.000000e+00 : f32
    %110 = vector.broadcast %cst_39 : f32 to vector<2x128xf32>
    %111 = arith.addf %110, %109 : vector<2x128xf32>
    %112 = arith.divf %110, %111 : vector<2x128xf32>
    %113 = math.tanh %107 : vector<2x128xf32>
    %114 = vector.extract_strided_slice %112 {offsets = [0, 32], sizes = [2, 32], strides = [1, 1]} : vector<2x128xf32> to vector<2x32xf32>
    %115 = arith.mulf %114, %100 : vector<2x32xf32>
    %116 = vector.extract_strided_slice %112 {offsets = [0, 0], sizes = [2, 32], strides = [1, 1]} : vector<2x128xf32> to vector<2x32xf32>
    %117 = vector.extract_strided_slice %113 {offsets = [0, 64], sizes = [2, 32], strides = [1, 1]} : vector<2x128xf32> to vector<2x32xf32>
    %118 = arith.mulf %116, %117 : vector<2x32xf32>
    %119 = arith.addf %115, %118 : vector<2x32xf32>
    %120 = vector.extract_strided_slice %112 {offsets = [0, 96], sizes = [2, 32], strides = [1, 1]} : vector<2x128xf32> to vector<2x32xf32>
    %121 = math.tanh %119 : vector<2x32xf32>
    %122 = arith.mulf %120, %121 : vector<2x32xf32>
    %c10_40 = arith.constant 10 : index
    %c0_41 = arith.constant 0 : index
    %123 = vector.load %arg10[%c10_40, %c0_41] : memref<16x32xf32, #tpu.memory_space<vmem>>, vector<2x32xf32>
    tpu.vector_store %arg10[%c10_40, %c0_41], %122 {strides = array<i32>} : memref<16x32xf32, #tpu.memory_space<vmem>>, vector<2x32xf32>,
    %c12 = arith.constant 12 : index
    %c0_42 = arith.constant 0 : index
    %124 = vector.load %arg11[%c12, %c0_42] : memref<16x128xf32, #tpu.memory_space<vmem>>, vector<2x128xf32>
    %cst_43 = arith.constant dense<0.000000e+00> : vector<2x128xf32>
    %125 = tpu.matmul %122, %1, %cst_43 {dimension_numbers = #tpu.dot_dimension_numbers<[1], [0], [0], [1], [0, 0, 1, 1], [], []>} : vector<2x32xf32>, vector<32x128xf32>, vector<2x128xf32> -> vector<2x128xf32>
    %126 = arith.addf %124, %125 : vector<2x128xf32>
    %127 = arith.negf %126 : vector<2x128xf32>
    %128 = math.exp %127 : vector<2x128xf32>
    %cst_44 = arith.constant 1.000000e+00 : f32
    %129 = vector.broadcast %cst_44 : f32 to vector<2x128xf32>
    %130 = arith.addf %129, %128 : vector<2x128xf32>
    %131 = arith.divf %129, %130 : vector<2x128xf32>
    %132 = math.tanh %126 : vector<2x128xf32>
    %133 = vector.extract_strided_slice %131 {offsets = [0, 32], sizes = [2, 32], strides = [1, 1]} : vector<2x128xf32> to vector<2x32xf32>
    %134 = arith.mulf %133, %119 : vector<2x32xf32>
    %135 = vector.extract_strided_slice %131 {offsets = [0, 0], sizes = [2, 32], strides = [1, 1]} : vector<2x128xf32> to vector<2x32xf32>
    %136 = vector.extract_strided_slice %132 {offsets = [0, 64], sizes = [2, 32], strides = [1, 1]} : vector<2x128xf32> to vector<2x32xf32>
    %137 = arith.mulf %135, %136 : vector<2x32xf32>
    %138 = arith.addf %134, %137 : vector<2x32xf32>
    %139 = vector.extract_strided_slice %131 {offsets = [0, 96], sizes = [2, 32], strides = [1, 1]} : vector<2x128xf32> to vector<2x32xf32>
    %140 = math.tanh %138 : vector<2x32xf32>
    %141 = arith.mulf %139, %140 : vector<2x32xf32>
    %c12_45 = arith.constant 12 : index
    %c0_46 = arith.constant 0 : index
    %142 = vector.load %arg10[%c12_45, %c0_46] : memref<16x32xf32, #tpu.memory_space<vmem>>, vector<2x32xf32>
    tpu.vector_store %arg10[%c12_45, %c0_46], %141 {strides = array<i32>} : memref<16x32xf32, #tpu.memory_space<vmem>>, vector<2x32xf32>,
    %c14 = arith.constant 14 : index
    %c0_47 = arith.constant 0 : index
    %143 = vector.load %arg11[%c14, %c0_47] : memref<16x128xf32, #tpu.memory_space<vmem>>, vector<2x128xf32>
    %cst_48 = arith.constant dense<0.000000e+00> : vector<2x128xf32>
    %144 = tpu.matmul %141, %1, %cst_48 {dimension_numbers = #tpu.dot_dimension_numbers<[1], [0], [0], [1], [0, 0, 1, 1], [], []>} : vector<2x32xf32>, vector<32x128xf32>, vector<2x128xf32> -> vector<2x128xf32>
    %145 = arith.addf %143, %144 : vector<2x128xf32>
    %146 = arith.negf %145 : vector<2x128xf32>
    %147 = math.exp %146 : vector<2x128xf32>
    %cst_49 = arith.constant 1.000000e+00 : f32
    %148 = vector.broadcast %cst_49 : f32 to vector<2x128xf32>
    %149 = arith.addf %148, %147 : vector<2x128xf32>
    %150 = arith.divf %148, %149 : vector<2x128xf32>
    %151 = math.tanh %145 : vector<2x128xf32>
    %152 = vector.extract_strided_slice %150 {offsets = [0, 32], sizes = [2, 32], strides = [1, 1]} : vector<2x128xf32> to vector<2x32xf32>
    %153 = arith.mulf %152, %138 : vector<2x32xf32>
    %154 = vector.extract_strided_slice %150 {offsets = [0, 0], sizes = [2, 32], strides = [1, 1]} : vector<2x128xf32> to vector<2x32xf32>
    %155 = vector.extract_strided_slice %151 {offsets = [0, 64], sizes = [2, 32], strides = [1, 1]} : vector<2x128xf32> to vector<2x32xf32>
    %156 = arith.mulf %154, %155 : vector<2x32xf32>
    %157 = arith.addf %153, %156 : vector<2x32xf32>
    %158 = vector.extract_strided_slice %150 {offsets = [0, 96], sizes = [2, 32], strides = [1, 1]} : vector<2x128xf32> to vector<2x32xf32>
    %159 = math.tanh %157 : vector<2x32xf32>
    %160 = arith.mulf %158, %159 : vector<2x32xf32>
    %c14_50 = arith.constant 14 : index
    %c0_51 = arith.constant 0 : index
    %161 = vector.load %arg10[%c14_50, %c0_51] : memref<16x32xf32, #tpu.memory_space<vmem>>, vector<2x32xf32>
    tpu.vector_store %arg10[%c14_50, %c0_51], %160 {strides = array<i32>} : memref<16x32xf32, #tpu.memory_space<vmem>>, vector<2x32xf32>,
    %c0_52 = arith.constant 0 : index
    %c0_53 = arith.constant 0 : index
    %162 = vector.load %arg4[%c0_52, %c0_53] : memref<32x128xf32, #tpu.memory_space<vmem>>, vector<32x128xf32>
    %c0_54 = arith.constant 0 : index
    %c0_55 = arith.constant 0 : index
    %163 = vector.load %arg5[%c0_54, %c0_55] : memref<32x128xf32, #tpu.memory_space<vmem>>, vector<32x128xf32>
    %c0_56 = arith.constant 0 : index
    %c0_57 = arith.constant 0 : index
    %164 = vector.load %arg6[%c0_56, %c0_57] : memref<1x128xf32, #tpu.memory_space<vmem>>, vector<1x128xf32>
    %c0_58 = arith.constant 0 : index
    %c0_59 = arith.constant 0 : index
    %165 = vector.load %arg10[%c0_58, %c0_59] : memref<16x32xf32, #tpu.memory_space<vmem>>, vector<16x32xf32>
    %cst_60 = arith.constant dense<0.000000e+00> : vector<16x128xf32>
    %166 = tpu.matmul %165, %162, %cst_60 {dimension_numbers = #tpu.dot_dimension_numbers<[1], [0], [0], [1], [0, 0, 1, 1], [], []>} : vector<16x32xf32>, vector<32x128xf32>, vector<16x128xf32> -> vector<16x128xf32>
    %167 = vector.broadcast %164 : vector<1x128xf32> to vector<16x128xf32>
    %168 = arith.addf %166, %167 : vector<16x128xf32>
    %c0_61 = arith.constant 0 : index
    %c0_62 = arith.constant 0 : index
    %169 = vector.load %arg11[%c0_61, %c0_62] : memref<16x128xf32, #tpu.memory_space<vmem>>, vector<16x128xf32>
    tpu.vector_store %arg11[%c0_61, %c0_62], %168 {strides = array<i32>} : memref<16x128xf32, #tpu.memory_space<vmem>>, vector<16x128xf32>,
    %cst_63 = arith.constant 0.000000e+00 : f32
    %170 = vector.broadcast %cst_63 : f32 to vector<2x32xf32>
    %cst_64 = arith.constant 0.000000e+00 : f32
    %171 = vector.broadcast %cst_64 : f32 to vector<2x32xf32>
    %c0_65 = arith.constant 0 : index
    %c0_66 = arith.constant 0 : index
    %172 = vector.load %arg11[%c0_65, %c0_66] : memref<16x128xf32, #tpu.memory_space<vmem>>, vector<2x128xf32>
    %cst_67 = arith.constant dense<0.000000e+00> : vector<2x128xf32>
    %173 = tpu.matmul %170, %163, %cst_67 {dimension_numbers = #tpu.dot_dimension_numbers<[1], [0], [0], [1], [0, 0, 1, 1], [], []>} : vector<2x32xf32>, vector<32x128xf32>, vector<2x128xf32> -> vector<2x128xf32>
    %174 = arith.addf %172, %173 : vector<2x128xf32>
    %175 = arith.negf %174 : vector<2x128xf32>
    %176 = math.exp %175 : vector<2x128xf32>
    %cst_68 = arith.constant 1.000000e+00 : f32
    %177 = vector.broadcast %cst_68 : f32 to vector<2x128xf32>
    %178 = arith.addf %177, %176 : vector<2x128xf32>
    %179 = arith.divf %177, %178 : vector<2x128xf32>
    %180 = math.tanh %174 : vector<2x128xf32>
    %181 = vector.extract_strided_slice %179 {offsets = [0, 32], sizes = [2, 32], strides = [1, 1]} : vector<2x128xf32> to vector<2x32xf32>
    %182 = arith.mulf %181, %171 : vector<2x32xf32>
    %183 = vector.extract_strided_slice %179 {offsets = [0, 0], sizes = [2, 32], strides = [1, 1]} : vector<2x128xf32> to vector<2x32xf32>
    %184 = vector.extract_strided_slice %180 {offsets = [0, 64], sizes = [2, 32], strides = [1, 1]} : vector<2x128xf32> to vector<2x32xf32>
    %185 = arith.mulf %183, %184 : vector<2x32xf32>
    %186 = arith.addf %182, %185 : vector<2x32xf32>
    %187 = vector.extract_strided_slice %179 {offsets = [0, 96], sizes = [2, 32], strides = [1, 1]} : vector<2x128xf32> to vector<2x32xf32>
    %188 = math.tanh %186 : vector<2x32xf32>
    %189 = arith.mulf %187, %188 : vector<2x32xf32>
    %c0_69 = arith.constant 0 : index
    %c0_70 = arith.constant 0 : index
    %190 = vector.load %arg10[%c0_69, %c0_70] : memref<16x32xf32, #tpu.memory_space<vmem>>, vector<2x32xf32>
    tpu.vector_store %arg10[%c0_69, %c0_70], %189 {strides = array<i32>} : memref<16x32xf32, #tpu.memory_space<vmem>>, vector<2x32xf32>,
    %c2_71 = arith.constant 2 : index
    %c0_72 = arith.constant 0 : index
    %191 = vector.load %arg11[%c2_71, %c0_72] : memref<16x128xf32, #tpu.memory_space<vmem>>, vector<2x128xf32>
    %cst_73 = arith.constant dense<0.000000e+00> : vector<2x128xf32>
    %192 = tpu.matmul %189, %163, %cst_73 {dimension_numbers = #tpu.dot_dimension_numbers<[1], [0], [0], [1], [0, 0, 1, 1], [], []>} : vector<2x32xf32>, vector<32x128xf32>, vector<2x128xf32> -> vector<2x128xf32>
    %193 = arith.addf %191, %192 : vector<2x128xf32>
    %194 = arith.negf %193 : vector<2x128xf32>
    %195 = math.exp %194 : vector<2x128xf32>
    %cst_74 = arith.constant 1.000000e+00 : f32
    %196 = vector.broadcast %cst_74 : f32 to vector<2x128xf32>
    %197 = arith.addf %196, %195 : vector<2x128xf32>
    %198 = arith.divf %196, %197 : vector<2x128xf32>
    %199 = math.tanh %193 : vector<2x128xf32>
    %200 = vector.extract_strided_slice %198 {offsets = [0, 32], sizes = [2, 32], strides = [1, 1]} : vector<2x128xf32> to vector<2x32xf32>
    %201 = arith.mulf %200, %186 : vector<2x32xf32>
    %202 = vector.extract_strided_slice %198 {offsets = [0, 0], sizes = [2, 32], strides = [1, 1]} : vector<2x128xf32> to vector<2x32xf32>
    %203 = vector.extract_strided_slice %199 {offsets = [0, 64], sizes = [2, 32], strides = [1, 1]} : vector<2x128xf32> to vector<2x32xf32>
    %204 = arith.mulf %202, %203 : vector<2x32xf32>
    %205 = arith.addf %201, %204 : vector<2x32xf32>
    %206 = vector.extract_strided_slice %198 {offsets = [0, 96], sizes = [2, 32], strides = [1, 1]} : vector<2x128xf32> to vector<2x32xf32>
    %207 = math.tanh %205 : vector<2x32xf32>
    %208 = arith.mulf %206, %207 : vector<2x32xf32>
    %c2_75 = arith.constant 2 : index
    %c0_76 = arith.constant 0 : index
    %209 = vector.load %arg10[%c2_75, %c0_76] : memref<16x32xf32, #tpu.memory_space<vmem>>, vector<2x32xf32>
    tpu.vector_store %arg10[%c2_75, %c0_76], %208 {strides = array<i32>} : memref<16x32xf32, #tpu.memory_space<vmem>>, vector<2x32xf32>,
    %c4_77 = arith.constant 4 : index
    %c0_78 = arith.constant 0 : index
    %210 = vector.load %arg11[%c4_77, %c0_78] : memref<16x128xf32, #tpu.memory_space<vmem>>, vector<2x128xf32>
    %cst_79 = arith.constant dense<0.000000e+00> : vector<2x128xf32>
    %211 = tpu.matmul %208, %163, %cst_79 {dimension_numbers = #tpu.dot_dimension_numbers<[1], [0], [0], [1], [0, 0, 1, 1], [], []>} : vector<2x32xf32>, vector<32x128xf32>, vector<2x128xf32> -> vector<2x128xf32>
    %212 = arith.addf %210, %211 : vector<2x128xf32>
    %213 = arith.negf %212 : vector<2x128xf32>
    %214 = math.exp %213 : vector<2x128xf32>
    %cst_80 = arith.constant 1.000000e+00 : f32
    %215 = vector.broadcast %cst_80 : f32 to vector<2x128xf32>
    %216 = arith.addf %215, %214 : vector<2x128xf32>
    %217 = arith.divf %215, %216 : vector<2x128xf32>
    %218 = math.tanh %212 : vector<2x128xf32>
    %219 = vector.extract_strided_slice %217 {offsets = [0, 32], sizes = [2, 32], strides = [1, 1]} : vector<2x128xf32> to vector<2x32xf32>
    %220 = arith.mulf %219, %205 : vector<2x32xf32>
    %221 = vector.extract_strided_slice %217 {offsets = [0, 0], sizes = [2, 32], strides = [1, 1]} : vector<2x128xf32> to vector<2x32xf32>
    %222 = vector.extract_strided_slice %218 {offsets = [0, 64], sizes = [2, 32], strides = [1, 1]} : vector<2x128xf32> to vector<2x32xf32>
    %223 = arith.mulf %221, %222 : vector<2x32xf32>
    %224 = arith.addf %220, %223 : vector<2x32xf32>
    %225 = vector.extract_strided_slice %217 {offsets = [0, 96], sizes = [2, 32], strides = [1, 1]} : vector<2x128xf32> to vector<2x32xf32>
    %226 = math.tanh %224 : vector<2x32xf32>
    %227 = arith.mulf %225, %226 : vector<2x32xf32>
    %c4_81 = arith.constant 4 : index
    %c0_82 = arith.constant 0 : index
    %228 = vector.load %arg10[%c4_81, %c0_82] : memref<16x32xf32, #tpu.memory_space<vmem>>, vector<2x32xf32>
    tpu.vector_store %arg10[%c4_81, %c0_82], %227 {strides = array<i32>} : memref<16x32xf32, #tpu.memory_space<vmem>>, vector<2x32xf32>,
    %c6_83 = arith.constant 6 : index
    %c0_84 = arith.constant 0 : index
    %229 = vector.load %arg11[%c6_83, %c0_84] : memref<16x128xf32, #tpu.memory_space<vmem>>, vector<2x128xf32>
    %cst_85 = arith.constant dense<0.000000e+00> : vector<2x128xf32>
    %230 = tpu.matmul %227, %163, %cst_85 {dimension_numbers = #tpu.dot_dimension_numbers<[1], [0], [0], [1], [0, 0, 1, 1], [], []>} : vector<2x32xf32>, vector<32x128xf32>, vector<2x128xf32> -> vector<2x128xf32>
    %231 = arith.addf %229, %230 : vector<2x128xf32>
    %232 = arith.negf %231 : vector<2x128xf32>
    %233 = math.exp %232 : vector<2x128xf32>
    %cst_86 = arith.constant 1.000000e+00 : f32
    %234 = vector.broadcast %cst_86 : f32 to vector<2x128xf32>
    %235 = arith.addf %234, %233 : vector<2x128xf32>
    %236 = arith.divf %234, %235 : vector<2x128xf32>
    %237 = math.tanh %231 : vector<2x128xf32>
    %238 = vector.extract_strided_slice %236 {offsets = [0, 32], sizes = [2, 32], strides = [1, 1]} : vector<2x128xf32> to vector<2x32xf32>
    %239 = arith.mulf %238, %224 : vector<2x32xf32>
    %240 = vector.extract_strided_slice %236 {offsets = [0, 0], sizes = [2, 32], strides = [1, 1]} : vector<2x128xf32> to vector<2x32xf32>
    %241 = vector.extract_strided_slice %237 {offsets = [0, 64], sizes = [2, 32], strides = [1, 1]} : vector<2x128xf32> to vector<2x32xf32>
    %242 = arith.mulf %240, %241 : vector<2x32xf32>
    %243 = arith.addf %239, %242 : vector<2x32xf32>
    %244 = vector.extract_strided_slice %236 {offsets = [0, 96], sizes = [2, 32], strides = [1, 1]} : vector<2x128xf32> to vector<2x32xf32>
    %245 = math.tanh %243 : vector<2x32xf32>
    %246 = arith.mulf %244, %245 : vector<2x32xf32>
    %c6_87 = arith.constant 6 : index
    %c0_88 = arith.constant 0 : index
    %247 = vector.load %arg10[%c6_87, %c0_88] : memref<16x32xf32, #tpu.memory_space<vmem>>, vector<2x32xf32>
    tpu.vector_store %arg10[%c6_87, %c0_88], %246 {strides = array<i32>} : memref<16x32xf32, #tpu.memory_space<vmem>>, vector<2x32xf32>,
    %c8_89 = arith.constant 8 : index
    %c0_90 = arith.constant 0 : index
    %248 = vector.load %arg11[%c8_89, %c0_90] : memref<16x128xf32, #tpu.memory_space<vmem>>, vector<2x128xf32>
    %cst_91 = arith.constant dense<0.000000e+00> : vector<2x128xf32>
    %249 = tpu.matmul %246, %163, %cst_91 {dimension_numbers = #tpu.dot_dimension_numbers<[1], [0], [0], [1], [0, 0, 1, 1], [], []>} : vector<2x32xf32>, vector<32x128xf32>, vector<2x128xf32> -> vector<2x128xf32>
    %250 = arith.addf %248, %249 : vector<2x128xf32>
    %251 = arith.negf %250 : vector<2x128xf32>
    %252 = math.exp %251 : vector<2x128xf32>
    %cst_92 = arith.constant 1.000000e+00 : f32
    %253 = vector.broadcast %cst_92 : f32 to vector<2x128xf32>
    %254 = arith.addf %253, %252 : vector<2x128xf32>
    %255 = arith.divf %253, %254 : vector<2x128xf32>
    %256 = math.tanh %250 : vector<2x128xf32>
    %257 = vector.extract_strided_slice %255 {offsets = [0, 32], sizes = [2, 32], strides = [1, 1]} : vector<2x128xf32> to vector<2x32xf32>
    %258 = arith.mulf %257, %243 : vector<2x32xf32>
    %259 = vector.extract_strided_slice %255 {offsets = [0, 0], sizes = [2, 32], strides = [1, 1]} : vector<2x128xf32> to vector<2x32xf32>
    %260 = vector.extract_strided_slice %256 {offsets = [0, 64], sizes = [2, 32], strides = [1, 1]} : vector<2x128xf32> to vector<2x32xf32>
    %261 = arith.mulf %259, %260 : vector<2x32xf32>
    %262 = arith.addf %258, %261 : vector<2x32xf32>
    %263 = vector.extract_strided_slice %255 {offsets = [0, 96], sizes = [2, 32], strides = [1, 1]} : vector<2x128xf32> to vector<2x32xf32>
    %264 = math.tanh %262 : vector<2x32xf32>
    %265 = arith.mulf %263, %264 : vector<2x32xf32>
    %c8_93 = arith.constant 8 : index
    %c0_94 = arith.constant 0 : index
    %266 = vector.load %arg10[%c8_93, %c0_94] : memref<16x32xf32, #tpu.memory_space<vmem>>, vector<2x32xf32>
    tpu.vector_store %arg10[%c8_93, %c0_94], %265 {strides = array<i32>} : memref<16x32xf32, #tpu.memory_space<vmem>>, vector<2x32xf32>,
    %c10_95 = arith.constant 10 : index
    %c0_96 = arith.constant 0 : index
    %267 = vector.load %arg11[%c10_95, %c0_96] : memref<16x128xf32, #tpu.memory_space<vmem>>, vector<2x128xf32>
    %cst_97 = arith.constant dense<0.000000e+00> : vector<2x128xf32>
    %268 = tpu.matmul %265, %163, %cst_97 {dimension_numbers = #tpu.dot_dimension_numbers<[1], [0], [0], [1], [0, 0, 1, 1], [], []>} : vector<2x32xf32>, vector<32x128xf32>, vector<2x128xf32> -> vector<2x128xf32>
    %269 = arith.addf %267, %268 : vector<2x128xf32>
    %270 = arith.negf %269 : vector<2x128xf32>
    %271 = math.exp %270 : vector<2x128xf32>
    %cst_98 = arith.constant 1.000000e+00 : f32
    %272 = vector.broadcast %cst_98 : f32 to vector<2x128xf32>
    %273 = arith.addf %272, %271 : vector<2x128xf32>
    %274 = arith.divf %272, %273 : vector<2x128xf32>
    %275 = math.tanh %269 : vector<2x128xf32>
    %276 = vector.extract_strided_slice %274 {offsets = [0, 32], sizes = [2, 32], strides = [1, 1]} : vector<2x128xf32> to vector<2x32xf32>
    %277 = arith.mulf %276, %262 : vector<2x32xf32>
    %278 = vector.extract_strided_slice %274 {offsets = [0, 0], sizes = [2, 32], strides = [1, 1]} : vector<2x128xf32> to vector<2x32xf32>
    %279 = vector.extract_strided_slice %275 {offsets = [0, 64], sizes = [2, 32], strides = [1, 1]} : vector<2x128xf32> to vector<2x32xf32>
    %280 = arith.mulf %278, %279 : vector<2x32xf32>
    %281 = arith.addf %277, %280 : vector<2x32xf32>
    %282 = vector.extract_strided_slice %274 {offsets = [0, 96], sizes = [2, 32], strides = [1, 1]} : vector<2x128xf32> to vector<2x32xf32>
    %283 = math.tanh %281 : vector<2x32xf32>
    %284 = arith.mulf %282, %283 : vector<2x32xf32>
    %c10_99 = arith.constant 10 : index
    %c0_100 = arith.constant 0 : index
    %285 = vector.load %arg10[%c10_99, %c0_100] : memref<16x32xf32, #tpu.memory_space<vmem>>, vector<2x32xf32>
    tpu.vector_store %arg10[%c10_99, %c0_100], %284 {strides = array<i32>} : memref<16x32xf32, #tpu.memory_space<vmem>>, vector<2x32xf32>,
    %c12_101 = arith.constant 12 : index
    %c0_102 = arith.constant 0 : index
    %286 = vector.load %arg11[%c12_101, %c0_102] : memref<16x128xf32, #tpu.memory_space<vmem>>, vector<2x128xf32>
    %cst_103 = arith.constant dense<0.000000e+00> : vector<2x128xf32>
    %287 = tpu.matmul %284, %163, %cst_103 {dimension_numbers = #tpu.dot_dimension_numbers<[1], [0], [0], [1], [0, 0, 1, 1], [], []>} : vector<2x32xf32>, vector<32x128xf32>, vector<2x128xf32> -> vector<2x128xf32>
    %288 = arith.addf %286, %287 : vector<2x128xf32>
    %289 = arith.negf %288 : vector<2x128xf32>
    %290 = math.exp %289 : vector<2x128xf32>
    %cst_104 = arith.constant 1.000000e+00 : f32
    %291 = vector.broadcast %cst_104 : f32 to vector<2x128xf32>
    %292 = arith.addf %291, %290 : vector<2x128xf32>
    %293 = arith.divf %291, %292 : vector<2x128xf32>
    %294 = math.tanh %288 : vector<2x128xf32>
    %295 = vector.extract_strided_slice %293 {offsets = [0, 32], sizes = [2, 32], strides = [1, 1]} : vector<2x128xf32> to vector<2x32xf32>
    %296 = arith.mulf %295, %281 : vector<2x32xf32>
    %297 = vector.extract_strided_slice %293 {offsets = [0, 0], sizes = [2, 32], strides = [1, 1]} : vector<2x128xf32> to vector<2x32xf32>
    %298 = vector.extract_strided_slice %294 {offsets = [0, 64], sizes = [2, 32], strides = [1, 1]} : vector<2x128xf32> to vector<2x32xf32>
    %299 = arith.mulf %297, %298 : vector<2x32xf32>
    %300 = arith.addf %296, %299 : vector<2x32xf32>
    %301 = vector.extract_strided_slice %293 {offsets = [0, 96], sizes = [2, 32], strides = [1, 1]} : vector<2x128xf32> to vector<2x32xf32>
    %302 = math.tanh %300 : vector<2x32xf32>
    %303 = arith.mulf %301, %302 : vector<2x32xf32>
    %c12_105 = arith.constant 12 : index
    %c0_106 = arith.constant 0 : index
    %304 = vector.load %arg10[%c12_105, %c0_106] : memref<16x32xf32, #tpu.memory_space<vmem>>, vector<2x32xf32>
    tpu.vector_store %arg10[%c12_105, %c0_106], %303 {strides = array<i32>} : memref<16x32xf32, #tpu.memory_space<vmem>>, vector<2x32xf32>,
    %c14_107 = arith.constant 14 : index
    %c0_108 = arith.constant 0 : index
    %305 = vector.load %arg11[%c14_107, %c0_108] : memref<16x128xf32, #tpu.memory_space<vmem>>, vector<2x128xf32>
    %cst_109 = arith.constant dense<0.000000e+00> : vector<2x128xf32>
    %306 = tpu.matmul %303, %163, %cst_109 {dimension_numbers = #tpu.dot_dimension_numbers<[1], [0], [0], [1], [0, 0, 1, 1], [], []>} : vector<2x32xf32>, vector<32x128xf32>, vector<2x128xf32> -> vector<2x128xf32>
    %307 = arith.addf %305, %306 : vector<2x128xf32>
    %308 = arith.negf %307 : vector<2x128xf32>
    %309 = math.exp %308 : vector<2x128xf32>
    %cst_110 = arith.constant 1.000000e+00 : f32
    %310 = vector.broadcast %cst_110 : f32 to vector<2x128xf32>
    %311 = arith.addf %310, %309 : vector<2x128xf32>
    %312 = arith.divf %310, %311 : vector<2x128xf32>
    %313 = math.tanh %307 : vector<2x128xf32>
    %314 = vector.extract_strided_slice %312 {offsets = [0, 32], sizes = [2, 32], strides = [1, 1]} : vector<2x128xf32> to vector<2x32xf32>
    %315 = arith.mulf %314, %300 : vector<2x32xf32>
    %316 = vector.extract_strided_slice %312 {offsets = [0, 0], sizes = [2, 32], strides = [1, 1]} : vector<2x128xf32> to vector<2x32xf32>
    %317 = vector.extract_strided_slice %313 {offsets = [0, 64], sizes = [2, 32], strides = [1, 1]} : vector<2x128xf32> to vector<2x32xf32>
    %318 = arith.mulf %316, %317 : vector<2x32xf32>
    %319 = arith.addf %315, %318 : vector<2x32xf32>
    %320 = vector.extract_strided_slice %312 {offsets = [0, 96], sizes = [2, 32], strides = [1, 1]} : vector<2x128xf32> to vector<2x32xf32>
    %321 = math.tanh %319 : vector<2x32xf32>
    %322 = arith.mulf %320, %321 : vector<2x32xf32>
    %c14_111 = arith.constant 14 : index
    %c0_112 = arith.constant 0 : index
    %323 = vector.load %arg10[%c14_111, %c0_112] : memref<16x32xf32, #tpu.memory_space<vmem>>, vector<2x32xf32>
    tpu.vector_store %arg10[%c14_111, %c0_112], %322 {strides = array<i32>} : memref<16x32xf32, #tpu.memory_space<vmem>>, vector<2x32xf32>,
    %c0_113 = arith.constant 0 : index
    %c0_114 = arith.constant 0 : index
    %324 = vector.load %arg10[%c0_113, %c0_114] : memref<16x32xf32, #tpu.memory_space<vmem>>, vector<16x32xf32>
    %c0_115 = arith.constant 0 : index
    %c0_116 = arith.constant 0 : index
    %325 = vector.load %arg7[%c0_115, %c0_116] : memref<1x32xf32, #tpu.memory_space<vmem>>, vector<1x32xf32>
    %326 = vector.broadcast %325 : vector<1x32xf32> to vector<16x32xf32>
    %327 = arith.mulf %324, %326 : vector<16x32xf32>
    %cst_117 = arith.constant dense<0.000000e+00> : vector<16xf32>
    %328 = vector.multi_reduction <add>, %327, %cst_117 [1] : vector<16x32xf32> to vector<16xf32>
    %329 = vector.shape_cast %328 : vector<16xf32> to vector<16x1xf32>
    %c0_118 = arith.constant 0 : index
    %c0_119 = arith.constant 0 : index
    %330 = vector.load %arg8[%c0_118, %c0_119] : memref<1x1xf32, #tpu.memory_space<vmem>>, vector<1x1xf32>
    %331 = vector.broadcast %330 : vector<1x1xf32> to vector<16x1xf32>
    %332 = arith.addf %329, %331 : vector<16x1xf32>
    %333 = arith.negf %332 : vector<16x1xf32>
    %334 = math.exp %333 : vector<16x1xf32>
    %cst_120 = arith.constant 1.000000e+00 : f32
    %335 = vector.broadcast %cst_120 : f32 to vector<16x1xf32>
    %336 = arith.addf %335, %334 : vector<16x1xf32>
    %337 = arith.divf %335, %336 : vector<16x1xf32>
    %338 = vector.extract_strided_slice %337 {offsets = [0, 0], sizes = [2, 1], strides = [1, 1]} : vector<16x1xf32> to vector<2x1xf32>
    %339 = vector.extract_strided_slice %337 {offsets = [2, 0], sizes = [2, 1], strides = [1, 1]} : vector<16x1xf32> to vector<2x1xf32>
    %340 = arith.addf %338, %339 : vector<2x1xf32>
    %341 = vector.extract_strided_slice %337 {offsets = [4, 0], sizes = [2, 1], strides = [1, 1]} : vector<16x1xf32> to vector<2x1xf32>
    %342 = arith.addf %340, %341 : vector<2x1xf32>
    %343 = vector.extract_strided_slice %337 {offsets = [6, 0], sizes = [2, 1], strides = [1, 1]} : vector<16x1xf32> to vector<2x1xf32>
    %344 = arith.addf %342, %343 : vector<2x1xf32>
    %345 = vector.extract_strided_slice %337 {offsets = [8, 0], sizes = [2, 1], strides = [1, 1]} : vector<16x1xf32> to vector<2x1xf32>
    %346 = arith.addf %344, %345 : vector<2x1xf32>
    %347 = vector.extract_strided_slice %337 {offsets = [10, 0], sizes = [2, 1], strides = [1, 1]} : vector<16x1xf32> to vector<2x1xf32>
    %348 = arith.addf %346, %347 : vector<2x1xf32>
    %349 = vector.extract_strided_slice %337 {offsets = [12, 0], sizes = [2, 1], strides = [1, 1]} : vector<16x1xf32> to vector<2x1xf32>
    %350 = arith.addf %348, %349 : vector<2x1xf32>
    %351 = vector.extract_strided_slice %337 {offsets = [14, 0], sizes = [2, 1], strides = [1, 1]} : vector<16x1xf32> to vector<2x1xf32>
    %352 = arith.addf %350, %351 : vector<2x1xf32>
    %cst_121 = arith.constant 1.250000e-01 : f32
    %353 = vector.broadcast %cst_121 : f32 to vector<2x1xf32>
    %354 = arith.mulf %352, %353 : vector<2x1xf32>
    %c0_122 = arith.constant 0 : index
    %c0_123 = arith.constant 0 : index
    %355 = vector.load %arg9[%c0_122, %c0_123] : memref<2x1xf32, #tpu.memory_space<vmem>>, vector<2x1xf32>
    tpu.vector_store %arg9[%c0_122, %c0_123], %354 {strides = array<i32>} : memref<2x1xf32, #tpu.memory_space<vmem>>, vector<2x1xf32>,
    return
  }
}

</mosaic_0001>

<llo_original>
// kernel: discriminator_forward.1
$region0: #{discriminator_forward.1}
  #allocation0 [shape = 'u32[]', space=smem, size = 0x4, offset = 0x4, fixed_abs, tag = 'smem constant byte address 0x4 - core index']
  #allocation1 [shape = 'u32[144,128]{1,0:T(1,128)}', space=vmem, size = 0x12000, scoped, tag = 'internal scratch']
  #allocation2 [shape = 'f32[16,32]{1,0:T(8,128)}', space=vmem, size = 0x2000, scoped, tag = 'scratch operand']
  #allocation3 [shape = 'f32[16,128]{1,0:T(8,128)}', space=vmem, size = 0x2000, scoped, tag = 'scratch operand']
  #allocation4 [shape = 'f32[1,1]{1,0:T(1,128)S(1)}', space=vmem, size = 0x200, scoped, tag = 'scoped memory for discriminator_forward.1']
  %s0 = inlined_call_operand.vmem [shape: f32[16,4], index: 0, kind: input, shape index: {}]
  %s1 = inlined_call_operand.hbm [shape: f32[4,128], index: 1, kind: input, shape index: {}]
  %s2 = inlined_call_operand.vmem [shape: f32[32,128], index: 2, kind: input, shape index: {}]
  %s3 = inlined_call_operand.vmem [shape: f32[1,128], index: 3, kind: input, shape index: {}]
  %s4 = inlined_call_operand.vmem [shape: f32[32,128], index: 4, kind: input, shape index: {}]
  %s5 = inlined_call_operand.hbm [shape: f32[32,128], index: 5, kind: input, shape index: {}]
  %s6 = inlined_call_operand.hbm [shape: f32[1,128], index: 6, kind: input, shape index: {}]
  %s7 = inlined_call_operand.hbm [shape: f32[1,32], index: 7, kind: input, shape index: {}]
  %s8 = inlined_call_operand.<no memory space> [shape: f32[1,1], index: 8, kind: input, shape index: {}]
  %s9 = inlined_call_operand.vmem [shape: f32[2,1], index: 9, kind: output, shape index: {}]
  %s10 = sld [smem:[#allocation0]]
  $region62: #{discriminator_forward.1} parent=0
    _
  %s12 = ssub.s32 1, %s10
  %s13 = scalar_select 0, %s12, %s10
  %v14 = vstv %s8
  %15 = vst [vmem:[#allocation4] sm:$0x1] %v14
  $region1: #{discriminator_forward.1} parent=0
    #allocation5 [shape = 'u8[2048]{0}', space=vmem, size = 0x800, scoped, tag = 'input window, operand 1, single buffered']
    #allocation6 [shape = 's32[1]{0}', space=sflag, size = 0x4, scoped, tag = 'scoped memory for discriminator_forward.1']
    #allocation7 [shape = 'u8[16384]{0}', space=vmem, size = 0x4000, scoped, tag = 'input window, operand 5, single buffered']
    #allocation8 [shape = 's32[1]{0}', space=sflag, size = 0x4, scoped, tag = 'scoped memory for discriminator_forward.1']
    #allocation9 [shape = 'u8[512]{0}', space=vmem, size = 0x400, scoped, tag = 'input window, operand 6, single buffered']
    #allocation10 [shape = 'u8[512]{0}', space=vmem, size = 0x400, scoped, tag = 'input window, operand 7, single buffered']
    #allocation11 [shape = 's32[1]{0}', space=sflag, size = 0x4, scoped, tag = 'scoped memory for discriminator_forward.1']
    %16 = vsyncpa [#allocation6], 0
    %17 = vsyncpa [#allocation8], 0
    %18 = vsyncpa [#allocation11], 0
    // Predicated region
    $region2: #{discriminator_forward.1} parent=1 // pred_check
      _
    $region3: #{discriminator_forward.1} parent=1 // pred_check_branch
      %20 = sbr.rel (0) target = $region5
    $region4: #{discriminator_forward.1} parent=1 // pred_region
      _
    $region5: #{discriminator_forward.1} parent=1 // pred_fallthru
      _
    // Predicated region
    $region6: #{discriminator_forward.1} parent=1 // pred_check
      _
    $region7: #{discriminator_forward.1} parent=1 // pred_check_branch
      %22 = sbr.rel (0) target = $region9
    $region8: #{discriminator_forward.1} parent=1 // pred_region
      %s24 = ssub.s32 64, 64
      %25 = vsyncadd [#allocation6], %s24
      %s27 = sshll.u32 [#allocation5], 4
      %s28 = int_to_ptr.vmem [resolvable:$true] %s27
      %30 = dma.hbm_to_vmem [thread:$0]  %s1, 64, %s28, [#allocation6]
    $region9: #{discriminator_forward.1} parent=1 // pred_fallthru
      _
    // Predicated region
    $region10: #{discriminator_forward.1} parent=1 // pred_check
      _
    $region11: #{discriminator_forward.1} parent=1 // pred_check_branch
      %32 = sbr.rel (0) target = $region13
    $region12: #{discriminator_forward.1} parent=1 // pred_region
      _
    $region13: #{discriminator_forward.1} parent=1 // pred_fallthru
      _
    // Predicated region
    $region14: #{discriminator_forward.1} parent=1 // pred_check
      _
    $region15: #{discriminator_forward.1} parent=1 // pred_check_branch
      %34 = sbr.rel (0) target = $region17
    $region16: #{discriminator_forward.1} parent=1 // pred_region
      _
    $region17: #{discriminator_forward.1} parent=1 // pred_fallthru
      _
    // Predicated region
    $region18: #{discriminator_forward.1} parent=1 // pred_check
      _
    $region19: #{discriminator_forward.1} parent=1 // pred_check_branch
      %36 = sbr.rel (0) target = $region21
    $region20: #{discriminator_forward.1} parent=1 // pred_region
      _
    $region21: #{discriminator_forward.1} parent=1 // pred_fallthru
      _
    // Predicated region
    $region22: #{discriminator_forward.1} parent=1 // pred_check
      _
    $region23: #{discriminator_forward.1} parent=1 // pred_check_branch
      %38 = sbr.rel (0) target = $region25
    $region24: #{discriminator_forward.1} parent=1 // pred_region
      %s40 = ssub.s32 512, 512
      %41 = vsyncadd [#allocation8], %s40
      %s42 = sshll.u32 [#allocation7], 4
      %s43 = int_to_ptr.vmem [resolvable:$true] %s42
      %48 = dma.hbm_to_vmem [thread:$0]  %s5, 512, %s43, [#allocation8], 128, 128, 8
    $region25: #{discriminator_forward.1} parent=1 // pred_fallthru
      _
    // Predicated region
    $region26: #{discriminator_forward.1} parent=1 // pred_check
      _
    $region27: #{discriminator_forward.1} parent=1 // pred_check_branch
      %50 = sbr.rel (0) target = $region29
    $region28: #{discriminator_forward.1} parent=1 // pred_region
      %s52 = ssub.s32 16, 16
      %53 = vsyncadd [#allocation8], %s52
      %s55 = sshll.u32 [#allocation9], 4
      %s56 = int_to_ptr.vmem [resolvable:$true] %s55
      %58 = dma.hbm_to_vmem [thread:$0]  %s6, 16, %s56, [#allocation8]
    $region29: #{discriminator_forward.1} parent=1 // pred_fallthru
      _
    // Predicated region
    $region30: #{discriminator_forward.1} parent=1 // pred_check
      _
    $region31: #{discriminator_forward.1} parent=1 // pred_check_branch
      %60 = sbr.rel (0) target = $region33
    $region32: #{discriminator_forward.1} parent=1 // pred_region
      %s62 = ssub.s32 16, 16
      %63 = vsyncadd [#allocation11], %s62
      %s65 = sshll.u32 [#allocation10], 4
      %s66 = int_to_ptr.vmem [resolvable:$true] %s65
      %68 = dma.hbm_to_vmem [thread:$0]  %s7, 16, %s66, [#allocation11]
    $region33: #{discriminator_forward.1} parent=1 // pred_fallthru
      _
    // Predicated region
    $region34: #{discriminator_forward.1} parent=1 // pred_check
      _
    $region35: #{discriminator_forward.1} parent=1 // pred_check_branch
      %70 = sbr.rel (0) target = $region37
    $region36: #{discriminator_forward.1} parent=1 // pred_region
      _
    $region37: #{discriminator_forward.1} parent=1 // pred_fallthru
      _
    // Predicated region
    $region38: #{discriminator_forward.1} parent=1 // pred_check
      _
    $region39: #{discriminator_forward.1} parent=1 // pred_check_branch
      %72 = sbr.rel (0) target = $region41
    $region40: #{discriminator_forward.1} parent=1 // pred_region
      %73 = dma.done [#allocation6], 64
    $region41: #{discriminator_forward.1} parent=1 // pred_fallthru
      _
    // Predicated region
    $region42: #{discriminator_forward.1} parent=1 // pred_check
      _
    $region43: #{discriminator_forward.1} parent=1 // pred_check_branch
      %75 = sbr.rel (0) target = $region45
    $region44: #{discriminator_forward.1} parent=1 // pred_region
      %76 = dma.done [#allocation8], 512
    $region45: #{discriminator_forward.1} parent=1 // pred_fallthru
      _
    // Predicated region
    $region46: #{discriminator_forward.1} parent=1 // pred_check
      _
    $region47: #{discriminator_forward.1} parent=1 // pred_check_branch
      %78 = sbr.rel (0) target = $region49
    $region48: #{discriminator_forward.1} parent=1 // pred_region
      %79 = dma.done [#allocation8], 16
    $region49: #{discriminator_forward.1} parent=1 // pred_fallthru
      _
    // Predicated region
    $region50: #{discriminator_forward.1} parent=1 // pred_check
      _
    $region51: #{discriminator_forward.1} parent=1 // pred_check_branch
      %81 = sbr.rel (0) target = $region53
    $region52: #{discriminator_forward.1} parent=1 // pred_region
      %82 = dma.done [#allocation11], 16
    $region53: #{discriminator_forward.1} parent=1 // pred_fallthru
      _
    %v83 = vld [vmem:[#allocation5] sm:$0xf]
    %v84 = vld [vmem:[%s2] sm:$0xff]
    %v85 = vld [vmem:[%s2 + $0x8] sm:$0xff]
    %v86 = vld [vmem:[%s2 + $0x10] sm:$0xff]
    %v87 = vld [vmem:[%s2 + $0x18] sm:$0xff]
    %v88 = vld [vmem:[%s3] sm:$0x1]
    %v89 = vld [vmem:[%s0] sm:$0xff]
    %v90 = vld [vmem:[%s0 + $0x8] sm:$0xff]
    %v92 = vlaneseq
    %v93 = vshrl.u32 %v92, 7
    %v94 = vsub.s32 0, %v93
    %v95 = vrot.slane %v88, %v94
    %vm97 = vcmask 31744
    %v99 = vsel %vm97, %v89, 0
    %v102 = vsel %vm97, %v90, 0
    %vm104 = vcmask 1043456
    %v106 = vsel %vm104, %v83, 0
    %108 = vmatprep.subr.mxu0 0.0
    %109 = vmatpush1.msra.mxu0 %v106
    %110 = vmatprep.subr.mxu0 0.0
    %111 = vmatpush1.msra.mxu0 0.0
    %112 = vmatprep.subr.mxu0 0.0
    %113 = vmatpush1.msra.mxu0 0.0
    %114 = vmatprep.subr.mxu0 0.0
    %115 = vmatpush1.msra.mxu0 0.0
    %116 = vmatprep.subr.mxu0 0.0
    %117 = vmatpush1.msra.mxu0 0.0
    %118 = vmatprep.subr.mxu0 0.0
    %119 = vmatpush1.msra.mxu0 0.0
    %120 = vmatprep.subr.mxu0 0.0
    %121 = vmatpush1.msra.mxu0 0.0
    %122 = vmatprep.subr.mxu0 0.0
    %123 = vmatpush1.msra.mxu0 0.0
    %124 = vmatprep.subr.mxu0 0.0
    %125 = vmatpush1.msra.mxu0 0.0
    %126 = vmatprep.subr.mxu0 0.0
    %127 = vmatpush1.msra.mxu0 0.0
    %128 = vmatprep.subr.mxu0 0.0
    %129 = vmatpush1.msra.mxu0 0.0
    %130 = vmatprep.subr.mxu0 0.0
    %131 = vmatpush1.msra.mxu0 0.0
    %132 = vmatprep.subr.mxu0 0.0
    %133 = vmatpush1.msra.mxu0 0.0
    %134 = vmatprep.subr.mxu0 0.0
    %135 = vmatpush1.msra.mxu0 0.0
    %136 = vmatprep.subr.mxu0 0.0
    %137 = vmatpush1.msra.mxu0 0.0
    %138 = vmatprep.subr.mxu0 0.0
    %139 = vmatpush1.msra.mxu0 0.0
    %140 = vmatprep.subr.mxu0 0.0
    %141 = vmatpush1.msra.mxu0 0.0
    %142 = vmatprep.subr.mxu0 0.0
    %143 = vmatpush1.msra.mxu0 0.0
    %144 = vmatprep.subr.mxu0 0.0
    %145 = vmatpush1.msra.mxu0 0.0
    %146 = vmatprep.subr.mxu0 0.0
    %147 = vmatpush1.msra.mxu0 0.0
    %148 = vmatprep.subr.mxu0 0.0
    %149 = vmatpush1.msra.mxu0 0.0
    %150 = vmatprep.subr.mxu0 0.0
    %151 = vmatpush1.msra.mxu0 0.0
    %152 = vmatprep.subr.mxu0 0.0
    %153 = vmatpush1.msra.mxu0 0.0
    %154 = vmatprep.subr.mxu0 0.0
    %155 = vmatpush1.msra.mxu0 0.0
    %156 = vmatprep.subr.mxu0 0.0
    %157 = vmatpush1.msra.mxu0 0.0
    %158 = vmatprep.subr.mxu0 0.0
    %159 = vmatpush1.msra.mxu0 0.0
    %160 = vmatprep.subr.mxu0 0.0
    %161 = vmatpush1.msra.mxu0 0.0
    %162 = vmatprep.subr.mxu0 0.0
    %163 = vmatpush1.msra.mxu0 0.0
    %164 = vmatprep.subr.mxu0 0.0
    %165 = vmatpush1.msra.mxu0 0.0
    %166 = vmatprep.subr.mxu0 0.0
    %167 = vmatpush1.msra.mxu0 0.0
    %168 = vmatprep.subr.mxu0 0.0
    %169 = vmatpush1.msra.mxu0 0.0
    %170 = vmatprep.subr.mxu0 0.0
    %171 = vmatpush1.msra.mxu0 0.0
    %172 = vmatprep.mubr.f32.mxu0 0.0
    %173 = vmatmul.mubr.f32.gmra.mrb[0].mxu0 %v99
    %v174 = vpop.f32.mrb[0].mxu0
    %v175 = vadd.f32 %v95, %v174
    %v176 = vpop.f32.mrb[0].mxu0
    %177 = vmatprep.mubr.f32.mxu0 0.0
    %178 = vmatmul.mubr.f32.gmra.mrb[0].mxu0 %v102
    %v179 = vpop.f32.mrb[0].mxu0
    %v180 = vadd.f32 %v95, %v179
    %v181 = vpop.f32.mrb[0].mxu0
    %182 = vdwg.mxu0
    %183 = vst [vmem:[#allocation3] sm:$0xff] %v175
    %184 = vst [vmem:[#allocation3 + $0x8] sm:$0xff] %v180
    %v185 = vld [vmem:[#allocation3] sm:$0x3]
    %vm186 = vcmask 261120
    %v188 = vsel %vm186, 0.0, 0
    %190 = vmatprep.subr.mxu0 0.0
    %191 = vmatpush1.msra.mxu0 %v84
    %192 = vmatprep.subr.mxu0 0.0
    %193 = vmatpush1.msra.mxu0 %v85
    %194 = vmatprep.subr.mxu0 0.0
    %195 = vmatpush1.msra.mxu0 %v86
    %196 = vmatprep.subr.mxu0 0.0
    %197 = vmatpush1.msra.mxu0 %v87
    %198 = vmatprep.subr.mxu0 0.0
    %199 = vmatpush1.msra.mxu0 0.0
    %200 = vmatprep.subr.mxu0 0.0
    %201 = vmatpush1.msra.mxu0 0.0
    %202 = vmatprep.subr.mxu0 0.0
    %203 = vmatpush1.msra.mxu0 0.0
    %204 = vmatprep.subr.mxu0 0.0
    %205 = vmatpush1.msra.mxu0 0.0
    %206 = vmatprep.subr.mxu0 0.0
    %207 = vmatpush1.msra.mxu0 0.0
    %208 = vmatprep.subr.mxu0 0.0
    %209 = vmatpush1.msra.mxu0 0.0
    %210 = vmatprep.subr.mxu0 0.0
    %211 = vmatpush1.msra.mxu0 0.0
    %212 = vmatprep.subr.mxu0 0.0
    %213 = vmatpush1.msra.mxu0 0.0
    %214 = vmatprep.subr.mxu0 0.0
    %215 = vmatpush1.msra.mxu0 0.0
    %216 = vmatprep.subr.mxu0 0.0
    %217 = vmatpush1.msra.mxu0 0.0
    %218 = vmatprep.subr.mxu0 0.0
    %219 = vmatpush1.msra.mxu0 0.0
    %220 = vmatprep.subr.mxu0 0.0
    %221 = vmatpush1.msra.mxu0 0.0
    %222 = vmatprep.subr.mxu0 0.0
    %223 = vmatpush1.msra.mxu0 0.0
    %224 = vmatprep.subr.mxu0 0.0
    %225 = vmatpush1.msra.mxu0 0.0
    %226 = vmatprep.subr.mxu0 0.0
    %227 = vmatpush1.msra.mxu0 0.0
    %228 = vmatprep.subr.mxu0 0.0
    %229 = vmatpush1.msra.mxu0 0.0
    %230 = vmatprep.subr.mxu0 0.0
    %231 = vmatpush1.msra.mxu0 0.0
    %232 = vmatprep.subr.mxu0 0.0
    %233 = vmatpush1.msra.mxu0 0.0
    %234 = vmatprep.subr.mxu0 0.0
    %235 = vmatpush1.msra.mxu0 0.0
    %236 = vmatprep.subr.mxu0 0.0
    %237 = vmatpush1.msra.mxu0 0.0
    %238 = vmatprep.subr.mxu0 0.0
    %239 = vmatpush1.msra.mxu0 0.0
    %240 = vmatprep.subr.mxu0 0.0
    %241 = vmatpush1.msra.mxu0 0.0
    %242 = vmatprep.subr.mxu0 0.0
    %243 = vmatpush1.msra.mxu0 0.0
    %244 = vmatprep.subr.mxu0 0.0
    %245 = vmatpush1.msra.mxu0 0.0
    %246 = vmatprep.subr.mxu0 0.0
    %247 = vmatpush1.msra.mxu0 0.0
    %248 = vmatprep.subr.mxu0 0.0
    %249 = vmatpush1.msra.mxu0 0.0
    %250 = vmatprep.subr.mxu0 0.0
    %251 = vmatpush1.msra.mxu0 0.0
    %252 = vmatprep.subr.mxu0 0.0
    %253 = vmatpush1.msra.mxu0 0.0
    %254 = vmatprep.mubr.f32.mxu0 0.0
    %255 = vmatmul.mubr.f32.gmra.mrb[0].mxu0 %v188
    %v256 = vpop.f32.mrb[0].mxu0
    %v257 = vadd.f32 0.0, %v256
    %v258 = vpop.f32.mrb[0].mxu0
    %259 = vdwg.mxu0
    %v260 = vadd.f32 %v185, %v257
    %v261 = vxor.u32 %v260, 2147483648
    %v262 = vmul.f32 %v261, 1.442695
    %v263 = vpow.pop %v262
    %v264 = vadd.f32 %v263, 1.0
    %v265 = vrcp.pop %v264
    %v266 = vmul.f32 1.0, %v265
    %v267 = vtanh.pop %v260
    %v268 = vmul.f32 %v266, 0.0
    %270 = vrot.lane.b32.xlu0 %v267, 64
    %v271 = vpop.permute.xlu0 %270
    %v273 = vmul.f32 %v266, %v271
    %275 = vrot.lane.b32.xlu0 %v273, 32
    %v276 = vpop.permute.xlu0 %275
    %v278 = vadd.f32 %v268, %v276
    %v279 = vtanh.pop %v278
    %281 = vrot.lane.b32.xlu0 %v279, 64
    %v282 = vpop.permute.xlu0 %281
    %v284 = vmul.f32 %v266, %v282
    %286 = vrot.lane.b32.xlu0 %v284, 32
    %v287 = vpop.permute.xlu0 %286
    %vm289 = vcmask 254976
    %290 = vst.msk [vmem:[#allocation2] sm:$0x3] %vm289, %v287
    %v291 = vld [vmem:[#allocation3 + $0x2] sm:$0x3]
    %v292 = vsel %vm186, %v287, 0
    %294 = vmatprep.subr.mxu0 0.0
    %295 = vmatpush1.msra.mxu0 %v84
    %296 = vmatprep.subr.mxu0 0.0
    %297 = vmatpush1.msra.mxu0 %v85
    %298 = vmatprep.subr.mxu0 0.0
    %299 = vmatpush1.msra.mxu0 %v86
    %300 = vmatprep.subr.mxu0 0.0
    %301 = vmatpush1.msra.mxu0 %v87
    %302 = vmatprep.subr.mxu0 0.0
    %303 = vmatpush1.msra.mxu0 0.0
    %304 = vmatprep.subr.mxu0 0.0
    %305 = vmatpush1.msra.mxu0 0.0
    %306 = vmatprep.subr.mxu0 0.0
    %307 = vmatpush1.msra.mxu0 0.0
    %308 = vmatprep.subr.mxu0 0.0
    %309 = vmatpush1.msra.mxu0 0.0
    %310 = vmatprep.subr.mxu0 0.0
    %311 = vmatpush1.msra.mxu0 0.0
    %312 = vmatprep.subr.mxu0 0.0
    %313 = vmatpush1.msra.mxu0 0.0
    %314 = vmatprep.subr.mxu0 0.0
    %315 = vmatpush1.msra.mxu0 0.0
    %316 = vmatprep.subr.mxu0 0.0
    %317 = vmatpush1.msra.mxu0 0.0
    %318 = vmatprep.subr.mxu0 0.0
    %319 = vmatpush1.msra.mxu0 0.0
    %320 = vmatprep.subr.mxu0 0.0
    %321 = vmatpush1.msra.mxu0 0.0
    %322 = vmatprep.subr.mxu0 0.0
    %323 = vmatpush1.msra.mxu0 0.0
    %324 = vmatprep.subr.mxu0 0.0
    %325 = vmatpush1.msra.mxu0 0.0
    %326 = vmatprep.subr.mxu0 0.0
    %327 = vmatpush1.msra.mxu0 0.0
    %328 = vmatprep.subr.mxu0 0.0
    %329 = vmatpush1.msra.mxu0 0.0
    %330 = vmatprep.subr.mxu0 0.0
    %331 = vmatpush1.msra.mxu0 0.0
    %332 = vmatprep.subr.mxu0 0.0
    %333 = vmatpush1.msra.mxu0 0.0
    %334 = vmatprep.subr.mxu0 0.0
    %335 = vmatpush1.msra.mxu0 0.0
    %336 = vmatprep.subr.mxu0 0.0
    %337 = vmatpush1.msra.mxu0 0.0
    %338 = vmatprep.subr.mxu0 0.0
    %339 = vmatpush1.msra.mxu0 0.0
    %340 = vmatprep.subr.mxu0 0.0
    %341 = vmatpush1.msra.mxu0 0.0
    %342 = vmatprep.subr.mxu0 0.0
    %343 = vmatpush1.msra.mxu0 0.0
    %344 = vmatprep.subr.mxu0 0.0
    %345 = vmatpush1.msra.mxu0 0.0
    %346 = vmatprep.subr.mxu0 0.0
    %347 = vmatpush1.msra.mxu0 0.0
    %348 = vmatprep.subr.mxu0 0.0
    %349 = vmatpush1.msra.mxu0 0.0
    %350 = vmatprep.subr.mxu0 0.0
    %351 = vmatpush1.msra.mxu0 0.0
    %352 = vmatprep.subr.mxu0 0.0
    %353 = vmatpush1.msra.mxu0 0.0
    %354 = vmatprep.subr.mxu0 0.0
    %355 = vmatpush1.msra.mxu0 0.0
    %356 = vmatprep.subr.mxu0 0.0
    %357 = vmatpush1.msra.mxu0 0.0
    %358 = vmatprep.mubr.f32.mxu0 0.0
    %359 = vmatmul.mubr.f32.gmra.mrb[0].mxu0 %v292
    %v360 = vpop.f32.mrb[0].mxu0
    %v361 = vadd.f32 0.0, %v360
    %v362 = vpop.f32.mrb[0].mxu0
    %363 = vdwg.mxu0
    %v364 = vadd.f32 %v291, %v361
    %v365 = vxor.u32 %v364, 2147483648
    %v366 = vmul.f32 %v365, 1.442695
    %v367 = vpow.pop %v366
    %v368 = vadd.f32 %v367, 1.0
    %v369 = vrcp.pop %v368
    %v370 = vmul.f32 1.0, %v369
    %v371 = vtanh.pop %v364
    %v372 = vmul.f32 %v370, %v278
    %374 = vrot.lane.b32.xlu0 %v371, 64
    %v375 = vpop.permute.xlu0 %374
    %v377 = vmul.f32 %v370, %v375
    %379 = vrot.lane.b32.xlu0 %v377, 32
    %v380 = vpop.permute.xlu0 %379
    %v382 = vadd.f32 %v372, %v380
    %v383 = vtanh.pop %v382
    %385 = vrot.lane.b32.xlu0 %v383, 64
    %v386 = vpop.permute.xlu0 %385
    %v388 = vmul.f32 %v370, %v386
    %390 = vrot.lane.b32.xlu0 %v388, 32
    %v391 = vpop.permute.xlu0 %390
    %393 = vst.msk [vmem:[#allocation2 + $0x2] sm:$0x3] %vm289, %v391
    %v394 = vld [vmem:[#allocation3 + $0x4] sm:$0x3]
    %v395 = vsel %vm186, %v391, 0
    %397 = vmatprep.subr.mxu0 0.0
    %398 = vmatpush1.msra.mxu0 %v84
    %399 = vmatprep.subr.mxu0 0.0
    %400 = vmatpush1.msra.mxu0 %v85
    %401 = vmatprep.subr.mxu0 0.0
    %402 = vmatpush1.msra.mxu0 %v86
    %403 = vmatprep.subr.mxu0 0.0
    %404 = vmatpush1.msra.mxu0 %v87
    %405 = vmatprep.subr.mxu0 0.0
    %406 = vmatpush1.msra.mxu0 0.0
    %407 = vmatprep.subr.mxu0 0.0
    %408 = vmatpush1.msra.mxu0 0.0
    %409 = vmatprep.subr.mxu0 0.0
    %410 = vmatpush1.msra.mxu0 0.0
    %411 = vmatprep.subr.mxu0 0.0
    %412 = vmatpush1.msra.mxu0 0.0
    %413 = vmatprep.subr.mxu0 0.0
    %414 = vmatpush1.msra.mxu0 0.0
    %415 = vmatprep.subr.mxu0 0.0
    %416 = vmatpush1.msra.mxu0 0.0
    %417 = vmatprep.subr.mxu0 0.0
    %418 = vmatpush1.msra.mxu0 0.0
    %419 = vmatprep.subr.mxu0 0.0
    %420 = vmatpush1.msra.mxu0 0.0
    %421 = vmatprep.subr.mxu0 0.0
    %422 = vmatpush1.msra.mxu0 0.0
    %423 = vmatprep.subr.mxu0 0.0
    %424 = vmatpush1.msra.mxu0 0.0
    %425 = vmatprep.subr.mxu0 0.0
    %426 = vmatpush1.msra.mxu0 0.0
    %427 = vmatprep.subr.mxu0 0.0
    %428 = vmatpush1.msra.mxu0 0.0
    %429 = vmatprep.subr.mxu0 0.0
    %430 = vmatpush1.msra.mxu0 0.0
    %431 = vmatprep.subr.mxu0 0.0
    %432 = vmatpush1.msra.mxu0 0.0
    %433 = vmatprep.subr.mxu0 0.0
    %434 = vmatpush1.msra.mxu0 0.0
    %435 = vmatprep.subr.mxu0 0.0
    %436 = vmatpush1.msra.mxu0 0.0
    %437 = vmatprep.subr.mxu0 0.0
    %438 = vmatpush1.msra.mxu0 0.0
    %439 = vmatprep.subr.mxu0 0.0
    %440 = vmatpush1.msra.mxu0 0.0
    %441 = vmatprep.subr.mxu0 0.0
    %442 = vmatpush1.msra.mxu0 0.0
    %443 = vmatprep.subr.mxu0 0.0
    %444 = vmatpush1.msra.mxu0 0.0
    %445 = vmatprep.subr.mxu0 0.0
    %446 = vmatpush1.msra.mxu0 0.0
    %447 = vmatprep.subr.mxu0 0.0
    %448 = vmatpush1.msra.mxu0 0.0
    %449 = vmatprep.subr.mxu0 0.0
    %450 = vmatpush1.msra.mxu0 0.0
    %451 = vmatprep.subr.mxu0 0.0
    %452 = vmatpush1.msra.mxu0 0.0
    %453 = vmatprep.subr.mxu0 0.0
    %454 = vmatpush1.msra.mxu0 0.0
    %455 = vmatprep.subr.mxu0 0.0
    %456 = vmatpush1.msra.mxu0 0.0
    %457 = vmatprep.subr.mxu0 0.0
    %458 = vmatpush1.msra.mxu0 0.0
    %459 = vmatprep.subr.mxu0 0.0
    %460 = vmatpush1.msra.mxu0 0.0
    %461 = vmatprep.mubr.f32.mxu0 0.0
    %462 = vmatmul.mubr.f32.gmra.mrb[0].mxu0 %v395
    %v463 = vpop.f32.mrb[0].mxu0
    %v464 = vadd.f32 0.0, %v463
    %v465 = vpop.f32.mrb[0].mxu0
    %466 = vdwg.mxu0
    %v467 = vadd.f32 %v394, %v464
    %v468 = vxor.u32 %v467, 2147483648
    %v469 = vmul.f32 %v468, 1.442695
    %v470 = vpow.pop %v469
    %v471 = vadd.f32 %v470, 1.0
    %v472 = vrcp.pop %v471
    %v473 = vmul.f32 1.0, %v472
    %v474 = vtanh.pop %v467
    %v475 = vmul.f32 %v473, %v382
    %477 = vrot.lane.b32.xlu0 %v474, 64
    %v478 = vpop.permute.xlu0 %477
    %v480 = vmul.f32 %v473, %v478
    %482 = vrot.lane.b32.xlu0 %v480, 32
    %v483 = vpop.permute.xlu0 %482
    %v485 = vadd.f32 %v475, %v483
    %v486 = vtanh.pop %v485
    %488 = vrot.lane.b32.xlu0 %v486, 64
    %v489 = vpop.permute.xlu0 %488
    %v491 = vmul.f32 %v473, %v489
    %493 = vrot.lane.b32.xlu0 %v491, 32
    %v494 = vpop.permute.xlu0 %493
    %496 = vst.msk [vmem:[#allocation2 + $0x4] sm:$0x3] %vm289, %v494
    %v497 = vld [vmem:[#allocation3 + $0x6] sm:$0x3]
    %v498 = vsel %vm186, %v494, 0
    %500 = vmatprep.subr.mxu0 0.0
    %501 = vmatpush1.msra.mxu0 %v84
    %502 = vmatprep.subr.mxu0 0.0
    %503 = vmatpush1.msra.mxu0 %v85
    %504 = vmatprep.subr.mxu0 0.0
    %505 = vmatpush1.msra.mxu0 %v86
    %506 = vmatprep.subr.mxu0 0.0
    %507 = vmatpush1.msra.mxu0 %v87
    %508 = vmatprep.subr.mxu0 0.0
    %509 = vmatpush1.msra.mxu0 0.0
    %510 = vmatprep.subr.mxu0 0.0
    %511 = vmatpush1.msra.mxu0 0.0
    %512 = vmatprep.subr.mxu0 0.0
    %513 = vmatpush1.msra.mxu0 0.0
    %514 = vmatprep.subr.mxu0 0.0
    %515 = vmatpush1.msra.mxu0 0.0
    %516 = vmatprep.subr.mxu0 0.0
    %517 = vmatpush1.msra.mxu0 0.0
    %518 = vmatprep.subr.mxu0 0.0
    %519 = vmatpush1.msra.mxu0 0.0
    %520 = vmatprep.subr.mxu0 0.0
    %521 = vmatpush1.msra.mxu0 0.0
    %522 = vmatprep.subr.mxu0 0.0
    %523 = vmatpush1.msra.mxu0 0.0
    %524 = vmatprep.subr.mxu0 0.0
    %525 = vmatpush1.msra.mxu0 0.0
    %526 = vmatprep.subr.mxu0 0.0
    %527 = vmatpush1.msra.mxu0 0.0
    %528 = vmatprep.subr.mxu0 0.0
    %529 = vmatpush1.msra.mxu0 0.0
    %530 = vmatprep.subr.mxu0 0.0
    %531 = vmatpush1.msra.mxu0 0.0
    %532 = vmatprep.subr.mxu0 0.0
    %533 = vmatpush1.msra.mxu0 0.0
    %534 = vmatprep.subr.mxu0 0.0
    %535 = vmatpush1.msra.mxu0 0.0
    %536 = vmatprep.subr.mxu0 0.0
    %537 = vmatpush1.msra.mxu0 0.0
    %538 = vmatprep.subr.mxu0 0.0
    %539 = vmatpush1.msra.mxu0 0.0
    %540 = vmatprep.subr.mxu0 0.0
    %541 = vmatpush1.msra.mxu0 0.0
    %542 = vmatprep.subr.mxu0 0.0
    %543 = vmatpush1.msra.mxu0 0.0
    %544 = vmatprep.subr.mxu0 0.0
    %545 = vmatpush1.msra.mxu0 0.0
    %546 = vmatprep.subr.mxu0 0.0
    %547 = vmatpush1.msra.mxu0 0.0
    %548 = vmatprep.subr.mxu0 0.0
    %549 = vmatpush1.msra.mxu0 0.0
    %550 = vmatprep.subr.mxu0 0.0
    %551 = vmatpush1.msra.mxu0 0.0
    %552 = vmatprep.subr.mxu0 0.0
    %553 = vmatpush1.msra.mxu0 0.0
    %554 = vmatprep.subr.mxu0 0.0
    %555 = vmatpush1.msra.mxu0 0.0
    %556 = vmatprep.subr.mxu0 0.0
    %557 = vmatpush1.msra.mxu0 0.0
    %558 = vmatprep.subr.mxu0 0.0
    %559 = vmatpush1.msra.mxu0 0.0
    %560 = vmatprep.subr.mxu0 0.0
    %561 = vmatpush1.msra.mxu0 0.0
    %562 = vmatprep.subr.mxu0 0.0
    %563 = vmatpush1.msra.mxu0 0.0
    %564 = vmatprep.mubr.f32.mxu0 0.0
    %565 = vmatmul.mubr.f32.gmra.mrb[0].mxu0 %v498
    %v566 = vpop.f32.mrb[0].mxu0
    %v567 = vadd.f32 0.0, %v566
    %v568 = vpop.f32.mrb[0].mxu0
    %569 = vdwg.mxu0
    %v570 = vadd.f32 %v497, %v567
    %v571 = vxor.u32 %v570, 2147483648
    %v572 = vmul.f32 %v571, 1.442695
    %v573 = vpow.pop %v572
    %v574 = vadd.f32 %v573, 1.0
    %v575 = vrcp.pop %v574
    %v576 = vmul.f32 1.0, %v575
    %v577 = vtanh.pop %v570
    %v578 = vmul.f32 %v576, %v485
    %580 = vrot.lane.b32.xlu0 %v577, 64
    %v581 = vpop.permute.xlu0 %580
    %v583 = vmul.f32 %v576, %v581
    %585 = vrot.lane.b32.xlu0 %v583, 32
    %v586 = vpop.permute.xlu0 %585
    %v588 = vadd.f32 %v578, %v586
    %v589 = vtanh.pop %v588
    %591 = vrot.lane.b32.xlu0 %v589, 64
    %v592 = vpop.permute.xlu0 %591
    %v594 = vmul.f32 %v576, %v592
    %596 = vrot.lane.b32.xlu0 %v594, 32
    %v597 = vpop.permute.xlu0 %596
    %599 = vst.msk [vmem:[#allocation2 + $0x6] sm:$0x3] %vm289, %v597
    %v600 = vld [vmem:[#allocation3 + $0x8] sm:$0x3]
    %v601 = vsel %vm186, %v597, 0
    %603 = vmatprep.subr.mxu0 0.0
    %604 = vmatpush1.msra.mxu0 %v84
    %605 = vmatprep.subr.mxu0 0.0
    %606 = vmatpush1.msra.mxu0 %v85
    %607 = vmatprep.subr.mxu0 0.0
    %608 = vmatpush1.msra.mxu0 %v86
    %609 = vmatprep.subr.mxu0 0.0
    %610 = vmatpush1.msra.mxu0 %v87
    %611 = vmatprep.subr.mxu0 0.0
    %612 = vmatpush1.msra.mxu0 0.0
    %613 = vmatprep.subr.mxu0 0.0
    %614 = vmatpush1.msra.mxu0 0.0
    %615 = vmatprep.subr.mxu0 0.0
    %616 = vmatpush1.msra.mxu0 0.0
    %617 = vmatprep.subr.mxu0 0.0
    %618 = vmatpush1.msra.mxu0 0.0
    %619 = vmatprep.subr.mxu0 0.0
    %620 = vmatpush1.msra.mxu0 0.0
    %621 = vmatprep.subr.mxu0 0.0
    %622 = vmatpush1.msra.mxu0 0.0
    %623 = vmatprep.subr.mxu0 0.0
    %624 = vmatpush1.msra.mxu0 0.0
    %625 = vmatprep.subr.mxu0 0.0
    %626 = vmatpush1.msra.mxu0 0.0
    %627 = vmatprep.subr.mxu0 0.0
    %628 = vmatpush1.msra.mxu0 0.0
    %629 = vmatprep.subr.mxu0 0.0
    %630 = vmatpush1.msra.mxu0 0.0
    %631 = vmatprep.subr.mxu0 0.0
    %632 = vmatpush1.msra.mxu0 0.0
    %633 = vmatprep.subr.mxu0 0.0
    %634 = vmatpush1.msra.mxu0 0.0
    %635 = vmatprep.subr.mxu0 0.0
    %636 = vmatpush1.msra.mxu0 0.0
    %637 = vmatprep.subr.mxu0 0.0
    %638 = vmatpush1.msra.mxu0 0.0
    %639 = vmatprep.subr.mxu0 0.0
    %640 = vmatpush1.msra.mxu0 0.0
    %641 = vmatprep.subr.mxu0 0.0
    %642 = vmatpush1.msra.mxu0 0.0
    %643 = vmatprep.subr.mxu0 0.0
    %644 = vmatpush1.msra.mxu0 0.0
    %645 = vmatprep.subr.mxu0 0.0
    %646 = vmatpush1.msra.mxu0 0.0
    %647 = vmatprep.subr.mxu0 0.0
    %648 = vmatpush1.msra.mxu0 0.0
    %649 = vmatprep.subr.mxu0 0.0
    %650 = vmatpush1.msra.mxu0 0.0
    %651 = vmatprep.subr.mxu0 0.0
    %652 = vmatpush1.msra.mxu0 0.0
    %653 = vmatprep.subr.mxu0 0.0
    %654 = vmatpush1.msra.mxu0 0.0
    %655 = vmatprep.subr.mxu0 0.0
    %656 = vmatpush1.msra.mxu0 0.0
    %657 = vmatprep.subr.mxu0 0.0
    %658 = vmatpush1.msra.mxu0 0.0
    %659 = vmatprep.subr.mxu0 0.0
    %660 = vmatpush1.msra.mxu0 0.0
    %661 = vmatprep.subr.mxu0 0.0
    %662 = vmatpush1.msra.mxu0 0.0
    %663 = vmatprep.subr.mxu0 0.0
    %664 = vmatpush1.msra.mxu0 0.0
    %665 = vmatprep.subr.mxu0 0.0
    %666 = vmatpush1.msra.mxu0 0.0
    %667 = vmatprep.mubr.f32.mxu0 0.0
    %668 = vmatmul.mubr.f32.gmra.mrb[0].mxu0 %v601
    %v669 = vpop.f32.mrb[0].mxu0
    %v670 = vadd.f32 0.0, %v669
    %v671 = vpop.f32.mrb[0].mxu0
    %672 = vdwg.mxu0
    %v673 = vadd.f32 %v600, %v670
    %v674 = vxor.u32 %v673, 2147483648
    %v675 = vmul.f32 %v674, 1.442695
    %v676 = vpow.pop %v675
    %v677 = vadd.f32 %v676, 1.0
    %v678 = vrcp.pop %v677
    %v679 = vmul.f32 1.0, %v678
    %v680 = vtanh.pop %v673
    %v681 = vmul.f32 %v679, %v588
    %683 = vrot.lane.b32.xlu0 %v680, 64
    %v684 = vpop.permute.xlu0 %683
    %v686 = vmul.f32 %v679, %v684
    %688 = vrot.lane.b32.xlu0 %v686, 32
    %v689 = vpop.permute.xlu0 %688
    %v691 = vadd.f32 %v681, %v689
    %v692 = vtanh.pop %v691
    %694 = vrot.lane.b32.xlu0 %v692, 64
    %v695 = vpop.permute.xlu0 %694
    %v697 = vmul.f32 %v679, %v695
    %699 = vrot.lane.b32.xlu0 %v697, 32
    %v700 = vpop.permute.xlu0 %699
    %702 = vst.msk [vmem:[#allocation2 + $0x8] sm:$0x3] %vm289, %v700
    %v703 = vld [vmem:[#allocation3 + $0xa] sm:$0x3]
    %v704 = vsel %vm186, %v700, 0
    %706 = vmatprep.subr.mxu0 0.0
    %707 = vmatpush1.msra.mxu0 %v84
    %708 = vmatprep.subr.mxu0 0.0
    %709 = vmatpush1.msra.mxu0 %v85
    %710 = vmatprep.subr.mxu0 0.0
    %711 = vmatpush1.msra.mxu0 %v86
    %712 = vmatprep.subr.mxu0 0.0
    %713 = vmatpush1.msra.mxu0 %v87
    %714 = vmatprep.subr.mxu0 0.0
    %715 = vmatpush1.msra.mxu0 0.0
    %716 = vmatprep.subr.mxu0 0.0
    %717 = vmatpush1.msra.mxu0 0.0
    %718 = vmatprep.subr.mxu0 0.0
    %719 = vmatpush1.msra.mxu0 0.0
    %720 = vmatprep.subr.mxu0 0.0
    %721 = vmatpush1.msra.mxu0 0.0
    %722 = vmatprep.subr.mxu0 0.0
    %723 = vmatpush1.msra.mxu0 0.0
    %724 = vmatprep.subr.mxu0 0.0
    %725 = vmatpush1.msra.mxu0 0.0
    %726 = vmatprep.subr.mxu0 0.0
    %727 = vmatpush1.msra.mxu0 0.0
    %728 = vmatprep.subr.mxu0 0.0
    %729 = vmatpush1.msra.mxu0 0.0
    %730 = vmatprep.subr.mxu0 0.0
    %731 = vmatpush1.msra.mxu0 0.0
    %732 = vmatprep.subr.mxu0 0.0
    %733 = vmatpush1.msra.mxu0 0.0
    %734 = vmatprep.subr.mxu0 0.0
    %735 = vmatpush1.msra.mxu0 0.0
    %736 = vmatprep.subr.mxu0 0.0
    %737 = vmatpush1.msra.mxu0 0.0
    %738 = vmatprep.subr.mxu0 0.0
    %739 = vmatpush1.msra.mxu0 0.0
    %740 = vmatprep.subr.mxu0 0.0
    %741 = vmatpush1.msra.mxu0 0.0
    %742 = vmatprep.subr.mxu0 0.0
    %743 = vmatpush1.msra.mxu0 0.0
    %744 = vmatprep.subr.mxu0 0.0
    %745 = vmatpush1.msra.mxu0 0.0
    %746 = vmatprep.subr.mxu0 0.0
    %747 = vmatpush1.msra.mxu0 0.0
    %748 = vmatprep.subr.mxu0 0.0
    %749 = vmatpush1.msra.mxu0 0.0
    %750 = vmatprep.subr.mxu0 0.0
    %751 = vmatpush1.msra.mxu0 0.0
    %752 = vmatprep.subr.mxu0 0.0
    %753 = vmatpush1.msra.mxu0 0.0
    %754 = vmatprep.subr.mxu0 0.0
    %755 = vmatpush1.msra.mxu0 0.0
    %756 = vmatprep.subr.mxu0 0.0
    %757 = vmatpush1.msra.mxu0 0.0
    %758 = vmatprep.subr.mxu0 0.0
    %759 = vmatpush1.msra.mxu0 0.0
    %760 = vmatprep.subr.mxu0 0.0
    %761 = vmatpush1.msra.mxu0 0.0
    %762 = vmatprep.subr.mxu0 0.0
    %763 = vmatpush1.msra.mxu0 0.0
    %764 = vmatprep.subr.mxu0 0.0
    %765 = vmatpush1.msra.mxu0 0.0
    %766 = vmatprep.subr.mxu0 0.0
    %767 = vmatpush1.msra.mxu0 0.0
    %768 = vmatprep.subr.mxu0 0.0
    %769 = vmatpush1.msra.mxu0 0.0
    %770 = vmatprep.mubr.f32.mxu0 0.0
    %771 = vmatmul.mubr.f32.gmra.mrb[0].mxu0 %v704
    %v772 = vpop.f32.mrb[0].mxu0
    %v773 = vadd.f32 0.0, %v772
    %v774 = vpop.f32.mrb[0].mxu0
    %775 = vdwg.mxu0
    %v776 = vadd.f32 %v703, %v773
    %v777 = vxor.u32 %v776, 2147483648
    %v778 = vmul.f32 %v777, 1.442695
    %v779 = vpow.pop %v778
    %v780 = vadd.f32 %v779, 1.0
    %v781 = vrcp.pop %v780
    %v782 = vmul.f32 1.0, %v781
    %v783 = vtanh.pop %v776
    %v784 = vmul.f32 %v782, %v691
    %786 = vrot.lane.b32.xlu0 %v783, 64
    %v787 = vpop.permute.xlu0 %786
    %v789 = vmul.f32 %v782, %v787
    %791 = vrot.lane.b32.xlu0 %v789, 32
    %v792 = vpop.permute.xlu0 %791
    %v794 = vadd.f32 %v784, %v792
    %v795 = vtanh.pop %v794
    %797 = vrot.lane.b32.xlu0 %v795, 64
    %v798 = vpop.permute.xlu0 %797
    %v800 = vmul.f32 %v782, %v798
    %802 = vrot.lane.b32.xlu0 %v800, 32
    %v803 = vpop.permute.xlu0 %802
    %805 = vst.msk [vmem:[#allocation2 + $0xa] sm:$0x3] %vm289, %v803
    %v806 = vld [vmem:[#allocation3 + $0xc] sm:$0x3]
    %v807 = vsel %vm186, %v803, 0
    %809 = vmatprep.subr.mxu0 0.0
    %810 = vmatpush1.msra.mxu0 %v84
    %811 = vmatprep.subr.mxu0 0.0
    %812 = vmatpush1.msra.mxu0 %v85
    %813 = vmatprep.subr.mxu0 0.0
    %814 = vmatpush1.msra.mxu0 %v86
    %815 = vmatprep.subr.mxu0 0.0
    %816 = vmatpush1.msra.mxu0 %v87
    %817 = vmatprep.subr.mxu0 0.0
    %818 = vmatpush1.msra.mxu0 0.0
    %819 = vmatprep.subr.mxu0 0.0
    %820 = vmatpush1.msra.mxu0 0.0
    %821 = vmatprep.subr.mxu0 0.0
    %822 = vmatpush1.msra.mxu0 0.0
    %823 = vmatprep.subr.mxu0 0.0
    %824 = vmatpush1.msra.mxu0 0.0
    %825 = vmatprep.subr.mxu0 0.0
    %826 = vmatpush1.msra.mxu0 0.0
    %827 = vmatprep.subr.mxu0 0.0
    %828 = vmatpush1.msra.mxu0 0.0
    %829 = vmatprep.subr.mxu0 0.0
    %830 = vmatpush1.msra.mxu0 0.0
    %831 = vmatprep.subr.mxu0 0.0
    %832 = vmatpush1.msra.mxu0 0.0
    %833 = vmatprep.subr.mxu0 0.0
    %834 = vmatpush1.msra.mxu0 0.0
    %835 = vmatprep.subr.mxu0 0.0
    %836 = vmatpush1.msra.mxu0 0.0
    %837 = vmatprep.subr.mxu0 0.0
    %838 = vmatpush1.msra.mxu0 0.0
    %839 = vmatprep.subr.mxu0 0.0
    %840 = vmatpush1.msra.mxu0 0.0
    %841 = vmatprep.subr.mxu0 0.0
    %842 = vmatpush1.msra.mxu0 0.0
    %843 = vmatprep.subr.mxu0 0.0
    %844 = vmatpush1.msra.mxu0 0.0
    %845 = vmatprep.subr.mxu0 0.0
    %846 = vmatpush1.msra.mxu0 0.0
    %847 = vmatprep.subr.mxu0 0.0
    %848 = vmatpush1.msra.mxu0 0.0
    %849 = vmatprep.subr.mxu0 0.0
    %850 = vmatpush1.msra.mxu0 0.0
    %851 = vmatprep.subr.mxu0 0.0
    %852 = vmatpush1.msra.mxu0 0.0
    %853 = vmatprep.subr.mxu0 0.0
    %854 = vmatpush1.msra.mxu0 0.0
    %855 = vmatprep.subr.mxu0 0.0
    %856 = vmatpush1.msra.mxu0 0.0
    %857 = vmatprep.subr.mxu0 0.0
    %858 = vmatpush1.msra.mxu0 0.0
    %859 = vmatprep.subr.mxu0 0.0
    %860 = vmatpush1.msra.mxu0 0.0
    %861 = vmatprep.subr.mxu0 0.0
    %862 = vmatpush1.msra.mxu0 0.0
    %863 = vmatprep.subr.mxu0 0.0
    %864 = vmatpush1.msra.mxu0 0.0
    %865 = vmatprep.subr.mxu0 0.0
    %866 = vmatpush1.msra.mxu0 0.0
    %867 = vmatprep.subr.mxu0 0.0
    %868 = vmatpush1.msra.mxu0 0.0
    %869 = vmatprep.subr.mxu0 0.0
    %870 = vmatpush1.msra.mxu0 0.0
    %871 = vmatprep.subr.mxu0 0.0
    %872 = vmatpush1.msra.mxu0 0.0
    %873 = vmatprep.mubr.f32.mxu0 0.0
    %874 = vmatmul.mubr.f32.gmra.mrb[0].mxu0 %v807
    %v875 = vpop.f32.mrb[0].mxu0
    %v876 = vadd.f32 0.0, %v875
    %v877 = vpop.f32.mrb[0].mxu0
    %878 = vdwg.mxu0
    %v879 = vadd.f32 %v806, %v876
    %v880 = vxor.u32 %v879, 2147483648
    %v881 = vmul.f32 %v880, 1.442695
    %v882 = vpow.pop %v881
    %v883 = vadd.f32 %v882, 1.0
    %v884 = vrcp.pop %v883
    %v885 = vmul.f32 1.0, %v884
    %v886 = vtanh.pop %v879
    %v887 = vmul.f32 %v885, %v794
    %889 = vrot.lane.b32.xlu0 %v886, 64
    %v890 = vpop.permute.xlu0 %889
    %v892 = vmul.f32 %v885, %v890
    %894 = vrot.lane.b32.xlu0 %v892, 32
    %v895 = vpop.permute.xlu0 %894
    %v897 = vadd.f32 %v887, %v895
    %v898 = vtanh.pop %v897
    %900 = vrot.lane.b32.xlu0 %v898, 64
    %v901 = vpop.permute.xlu0 %900
    %v903 = vmul.f32 %v885, %v901
    %905 = vrot.lane.b32.xlu0 %v903, 32
    %v906 = vpop.permute.xlu0 %905
    %908 = vst.msk [vmem:[#allocation2 + $0xc] sm:$0x3] %vm289, %v906
    %v909 = vld [vmem:[#allocation3 + $0xe] sm:$0x3]
    %v910 = vsel %vm186, %v906, 0
    %912 = vmatprep.subr.mxu0 0.0
    %913 = vmatpush1.msra.mxu0 %v84
    %914 = vmatprep.subr.mxu0 0.0
    %915 = vmatpush1.msra.mxu0 %v85
    %916 = vmatprep.subr.mxu0 0.0
    %917 = vmatpush1.msra.mxu0 %v86
    %918 = vmatprep.subr.mxu0 0.0
    %919 = vmatpush1.msra.mxu0 %v87
    %920 = vmatprep.subr.mxu0 0.0
    %921 = vmatpush1.msra.mxu0 0.0
    %922 = vmatprep.subr.mxu0 0.0
    %923 = vmatpush1.msra.mxu0 0.0
    %924 = vmatprep.subr.mxu0 0.0
    %925 = vmatpush1.msra.mxu0 0.0
    %926 = vmatprep.subr.mxu0 0.0
    %927 = vmatpush1.msra.mxu0 0.0
    %928 = vmatprep.subr.mxu0 0.0
    %929 = vmatpush1.msra.mxu0 0.0
    %930 = vmatprep.subr.mxu0 0.0
    %931 = vmatpush1.msra.mxu0 0.0
    %932 = vmatprep.subr.mxu0 0.0
    %933 = vmatpush1.msra.mxu0 0.0
    %934 = vmatprep.subr.mxu0 0.0
    %935 = vmatpush1.msra.mxu0 0.0
    %936 = vmatprep.subr.mxu0 0.0
    %937 = vmatpush1.msra.mxu0 0.0
    %938 = vmatprep.subr.mxu0 0.0
    %939 = vmatpush1.msra.mxu0 0.0
    %940 = vmatprep.subr.mxu0 0.0
    %941 = vmatpush1.msra.mxu0 0.0
    %942 = vmatprep.subr.mxu0 0.0
    %943 = vmatpush1.msra.mxu0 0.0
    %944 = vmatprep.subr.mxu0 0.0
    %945 = vmatpush1.msra.mxu0 0.0
    %946 = vmatprep.subr.mxu0 0.0
    %947 = vmatpush1.msra.mxu0 0.0
    %948 = vmatprep.subr.mxu0 0.0
    %949 = vmatpush1.msra.mxu0 0.0
    %950 = vmatprep.subr.mxu0 0.0
    %951 = vmatpush1.msra.mxu0 0.0
    %952 = vmatprep.subr.mxu0 0.0
    %953 = vmatpush1.msra.mxu0 0.0
    %954 = vmatprep.subr.mxu0 0.0
    %955 = vmatpush1.msra.mxu0 0.0
    %956 = vmatprep.subr.mxu0 0.0
    %957 = vmatpush1.msra.mxu0 0.0
    %958 = vmatprep.subr.mxu0 0.0
    %959 = vmatpush1.msra.mxu0 0.0
    %960 = vmatprep.subr.mxu0 0.0
    %961 = vmatpush1.msra.mxu0 0.0
    %962 = vmatprep.subr.mxu0 0.0
    %963 = vmatpush1.msra.mxu0 0.0
    %964 = vmatprep.subr.mxu0 0.0
    %965 = vmatpush1.msra.mxu0 0.0
    %966 = vmatprep.subr.mxu0 0.0
    %967 = vmatpush1.msra.mxu0 0.0
    %968 = vmatprep.subr.mxu0 0.0
    %969 = vmatpush1.msra.mxu0 0.0
    %970 = vmatprep.subr.mxu0 0.0
    %971 = vmatpush1.msra.mxu0 0.0
    %972 = vmatprep.subr.mxu0 0.0
    %973 = vmatpush1.msra.mxu0 0.0
    %974 = vmatprep.subr.mxu0 0.0
    %975 = vmatpush1.msra.mxu0 0.0
    %976 = vmatprep.mubr.f32.mxu0 0.0
    %977 = vmatmul.mubr.f32.gmra.mrb[0].mxu0 %v910
    %v978 = vpop.f32.mrb[0].mxu0
    %v979 = vadd.f32 0.0, %v978
    %v980 = vpop.f32.mrb[0].mxu0
    %981 = vdwg.mxu0
    %v982 = vadd.f32 %v909, %v979
    %v983 = vxor.u32 %v982, 2147483648
    %v984 = vmul.f32 %v983, 1.442695
    %v985 = vpow.pop %v984
    %v986 = vadd.f32 %v985, 1.0
    %v987 = vrcp.pop %v986
    %v988 = vmul.f32 1.0, %v987
    %v989 = vtanh.pop %v982
    %v990 = vmul.f32 %v988, %v897
    %992 = vrot.lane.b32.xlu0 %v989, 64
    %v993 = vpop.permute.xlu0 %992
    %v995 = vmul.f32 %v988, %v993
    %997 = vrot.lane.b32.xlu0 %v995, 32
    %v998 = vpop.permute.xlu0 %997
    %v1000 = vadd.f32 %v990, %v998
    %v1001 = vtanh.pop %v1000
    %1003 = vrot.lane.b32.xlu0 %v1001, 64
    %v1004 = vpop.permute.xlu0 %1003
    %v1006 = vmul.f32 %v988, %v1004
    %1008 = vrot.lane.b32.xlu0 %v1006, 32
    %v1009 = vpop.permute.xlu0 %1008
    %1011 = vst.msk [vmem:[#allocation2 + $0xe] sm:$0x3] %vm289, %v1009
    %v1012 = vld [vmem:[%s4] sm:$0xff]
    %v1013 = vld [vmem:[%s4 + $0x8] sm:$0xff]
    %v1014 = vld [vmem:[%s4 + $0x10] sm:$0xff]
    %v1015 = vld [vmem:[%s4 + $0x18] sm:$0xff]
    %v1016 = vld [vmem:[#allocation7] sm:$0xff]
    %v1017 = vld [vmem:[#allocation7 + $0x8] sm:$0xff]
    %v1018 = vld [vmem:[#allocation7 + $0x10] sm:$0xff]
    %v1019 = vld [vmem:[#allocation7 + $0x18] sm:$0xff]
    %v1020 = vld [vmem:[#allocation9] sm:$0x1]
    %v1021 = vld [vmem:[#allocation2] sm:$0xff]
    %v1022 = vld [vmem:[#allocation2 + $0x8] sm:$0xff]
    %v1024 = vlaneseq
    %v1025 = vshrl.u32 %v1024, 7
    %v1026 = vsub.s32 0, %v1025
    %v1027 = vrot.slane %v1020, %v1026
    %v1030 = vsel %vm186, %v1021, 0
    %v1033 = vsel %vm186, %v1022, 0
    %1035 = vmatprep.subr.mxu0 0.0
    %1036 = vmatpush1.msra.mxu0 %v1012
    %1037 = vmatprep.subr.mxu0 0.0
    %1038 = vmatpush1.msra.mxu0 %v1013
    %1039 = vmatprep.subr.mxu0 0.0
    %1040 = vmatpush1.msra.mxu0 %v1014
    %1041 = vmatprep.subr.mxu0 0.0
    %1042 = vmatpush1.msra.mxu0 %v1015
    %1043 = vmatprep.subr.mxu0 0.0
    %1044 = vmatpush1.msra.mxu0 0.0
    %1045 = vmatprep.subr.mxu0 0.0
    %1046 = vmatpush1.msra.mxu0 0.0
    %1047 = vmatprep.subr.mxu0 0.0
    %1048 = vmatpush1.msra.mxu0 0.0
    %1049 = vmatprep.subr.mxu0 0.0
    %1050 = vmatpush1.msra.mxu0 0.0
    %1051 = vmatprep.subr.mxu0 0.0
    %1052 = vmatpush1.msra.mxu0 0.0
    %1053 = vmatprep.subr.mxu0 0.0
    %1054 = vmatpush1.msra.mxu0 0.0
    %1055 = vmatprep.subr.mxu0 0.0
    %1056 = vmatpush1.msra.mxu0 0.0
    %1057 = vmatprep.subr.mxu0 0.0
    %1058 = vmatpush1.msra.mxu0 0.0
    %1059 = vmatprep.subr.mxu0 0.0
    %1060 = vmatpush1.msra.mxu0 0.0
    %1061 = vmatprep.subr.mxu0 0.0
    %1062 = vmatpush1.msra.mxu0 0.0
    %1063 = vmatprep.subr.mxu0 0.0
    %1064 = vmatpush1.msra.mxu0 0.0
    %1065 = vmatprep.subr.mxu0 0.0
    %1066 = vmatpush1.msra.mxu0 0.0
    %1067 = vmatprep.subr.mxu0 0.0
    %1068 = vmatpush1.msra.mxu0 0.0
    %1069 = vmatprep.subr.mxu0 0.0
    %1070 = vmatpush1.msra.mxu0 0.0
    %1071 = vmatprep.subr.mxu0 0.0
    %1072 = vmatpush1.msra.mxu0 0.0
    %1073 = vmatprep.subr.mxu0 0.0
    %1074 = vmatpush1.msra.mxu0 0.0
    %1075 = vmatprep.subr.mxu0 0.0
    %1076 = vmatpush1.msra.mxu0 0.0
    %1077 = vmatprep.subr.mxu0 0.0
    %1078 = vmatpush1.msra.mxu0 0.0
    %1079 = vmatprep.subr.mxu0 0.0
    %1080 = vmatpush1.msra.mxu0 0.0
    %1081 = vmatprep.subr.mxu0 0.0
    %1082 = vmatpush1.msra.mxu0 0.0
    %1083 = vmatprep.subr.mxu0 0.0
    %1084 = vmatpush1.msra.mxu0 0.0
    %1085 = vmatprep.subr.mxu0 0.0
    %1086 = vmatpush1.msra.mxu0 0.0
    %1087 = vmatprep.subr.mxu0 0.0
    %1088 = vmatpush1.msra.mxu0 0.0
    %1089 = vmatprep.subr.mxu0 0.0
    %1090 = vmatpush1.msra.mxu0 0.0
    %1091 = vmatprep.subr.mxu0 0.0
    %1092 = vmatpush1.msra.mxu0 0.0
    %1093 = vmatprep.subr.mxu0 0.0
    %1094 = vmatpush1.msra.mxu0 0.0
    %1095 = vmatprep.subr.mxu0 0.0
    %1096 = vmatpush1.msra.mxu0 0.0
    %1097 = vmatprep.subr.mxu0 0.0
    %1098 = vmatpush1.msra.mxu0 0.0
    %1099 = vmatprep.mubr.f32.mxu0 0.0
    %1100 = vmatmul.mubr.f32.gmra.mrb[0].mxu0 %v1030
    %v1101 = vpop.f32.mrb[0].mxu0
    %v1102 = vadd.f32 %v1027, %v1101
    %v1103 = vpop.f32.mrb[0].mxu0
    %1104 = vmatprep.mubr.f32.mxu0 0.0
    %1105 = vmatmul.mubr.f32.gmra.mrb[0].mxu0 %v1033
    %v1106 = vpop.f32.mrb[0].mxu0
    %v1107 = vadd.f32 %v1027, %v1106
    %v1108 = vpop.f32.mrb[0].mxu0
    %1109 = vdwg.mxu0
    %1110 = vst [vmem:[#allocation3] sm:$0xff] %v1102
    %1111 = vst [vmem:[#allocation3 + $0x8] sm:$0xff] %v1107
    %v1112 = vld [vmem:[#allocation3] sm:$0x3]
    %1113 = vmatprep.subr.mxu0 0.0
    %1114 = vmatpush1.msra.mxu0 %v1016
    %1115 = vmatprep.subr.mxu0 0.0
    %1116 = vmatpush1.msra.mxu0 %v1017
    %1117 = vmatprep.subr.mxu0 0.0
    %1118 = vmatpush1.msra.mxu0 %v1018
    %1119 = vmatprep.subr.mxu0 0.0
    %1120 = vmatpush1.msra.mxu0 %v1019
    %1121 = vmatprep.subr.mxu0 0.0
    %1122 = vmatpush1.msra.mxu0 0.0
    %1123 = vmatprep.subr.mxu0 0.0
    %1124 = vmatpush1.msra.mxu0 0.0
    %1125 = vmatprep.subr.mxu0 0.0
    %1126 = vmatpush1.msra.mxu0 0.0
    %1127 = vmatprep.subr.mxu0 0.0
    %1128 = vmatpush1.msra.mxu0 0.0
    %1129 = vmatprep.subr.mxu0 0.0
    %1130 = vmatpush1.msra.mxu0 0.0
    %1131 = vmatprep.subr.mxu0 0.0
    %1132 = vmatpush1.msra.mxu0 0.0
    %1133 = vmatprep.subr.mxu0 0.0
    %1134 = vmatpush1.msra.mxu0 0.0
    %1135 = vmatprep.subr.mxu0 0.0
    %1136 = vmatpush1.msra.mxu0 0.0
    %1137 = vmatprep.subr.mxu0 0.0
    %1138 = vmatpush1.msra.mxu0 0.0
    %1139 = vmatprep.subr.mxu0 0.0
    %1140 = vmatpush1.msra.mxu0 0.0
    %1141 = vmatprep.subr.mxu0 0.0
    %1142 = vmatpush1.msra.mxu0 0.0
    %1143 = vmatprep.subr.mxu0 0.0
    %1144 = vmatpush1.msra.mxu0 0.0
    %1145 = vmatprep.subr.mxu0 0.0
    %1146 = vmatpush1.msra.mxu0 0.0
    %1147 = vmatprep.subr.mxu0 0.0
    %1148 = vmatpush1.msra.mxu0 0.0
    %1149 = vmatprep.subr.mxu0 0.0
    %1150 = vmatpush1.msra.mxu0 0.0
    %1151 = vmatprep.subr.mxu0 0.0
    %1152 = vmatpush1.msra.mxu0 0.0
    %1153 = vmatprep.subr.mxu0 0.0
    %1154 = vmatpush1.msra.mxu0 0.0
    %1155 = vmatprep.subr.mxu0 0.0
    %1156 = vmatpush1.msra.mxu0 0.0
    %1157 = vmatprep.subr.mxu0 0.0
    %1158 = vmatpush1.msra.mxu0 0.0
    %1159 = vmatprep.subr.mxu0 0.0
    %1160 = vmatpush1.msra.mxu0 0.0
    %1161 = vmatprep.subr.mxu0 0.0
    %1162 = vmatpush1.msra.mxu0 0.0
    %1163 = vmatprep.subr.mxu0 0.0
    %1164 = vmatpush1.msra.mxu0 0.0
    %1165 = vmatprep.subr.mxu0 0.0
    %1166 = vmatpush1.msra.mxu0 0.0
    %1167 = vmatprep.subr.mxu0 0.0
    %1168 = vmatpush1.msra.mxu0 0.0
    %1169 = vmatprep.subr.mxu0 0.0
    %1170 = vmatpush1.msra.mxu0 0.0
    %1171 = vmatprep.subr.mxu0 0.0
    %1172 = vmatpush1.msra.mxu0 0.0
    %1173 = vmatprep.subr.mxu0 0.0
    %1174 = vmatpush1.msra.mxu0 0.0
    %1175 = vmatprep.subr.mxu0 0.0
    %1176 = vmatpush1.msra.mxu0 0.0
    %1177 = vmatprep.mubr.f32.mxu0 0.0
    %1178 = vmatmul.mubr.f32.gmra.mrb[0].mxu0 %v188
    %v1179 = vpop.f32.mrb[0].mxu0
    %v1180 = vadd.f32 0.0, %v1179
    %v1181 = vpop.f32.mrb[0].mxu0
    %1182 = vdwg.mxu0
    %v1183 = vadd.f32 %v1112, %v1180
    %v1184 = vxor.u32 %v1183, 2147483648
    %v1185 = vmul.f32 %v1184, 1.442695
    %v1186 = vpow.pop %v1185
    %v1187 = vadd.f32 %v1186, 1.0
    %v1188 = vrcp.pop %v1187
    %v1189 = vmul.f32 1.0, %v1188
    %v1190 = vtanh.pop %v1183
    %v1191 = vmul.f32 %v1189, 0.0
    %1193 = vrot.lane.b32.xlu0 %v1190, 64
    %v1194 = vpop.permute.xlu0 %1193
    %v1196 = vmul.f32 %v1189, %v1194
    %1198 = vrot.lane.b32.xlu0 %v1196, 32
    %v1199 = vpop.permute.xlu0 %1198
    %v1201 = vadd.f32 %v1191, %v1199
    %v1202 = vtanh.pop %v1201
    %1204 = vrot.lane.b32.xlu0 %v1202, 64
    %v1205 = vpop.permute.xlu0 %1204
    %v1207 = vmul.f32 %v1189, %v1205
    %1209 = vrot.lane.b32.xlu0 %v1207, 32
    %v1210 = vpop.permute.xlu0 %1209
    %1212 = vst.msk [vmem:[#allocation2] sm:$0x3] %vm289, %v1210
    %v1213 = vld [vmem:[#allocation3 + $0x2] sm:$0x3]
    %v1214 = vsel %vm186, %v1210, 0
    %1216 = vmatprep.subr.mxu0 0.0
    %1217 = vmatpush1.msra.mxu0 %v1016
    %1218 = vmatprep.subr.mxu0 0.0
    %1219 = vmatpush1.msra.mxu0 %v1017
    %1220 = vmatprep.subr.mxu0 0.0
    %1221 = vmatpush1.msra.mxu0 %v1018
    %1222 = vmatprep.subr.mxu0 0.0
    %1223 = vmatpush1.msra.mxu0 %v1019
    %1224 = vmatprep.subr.mxu0 0.0
    %1225 = vmatpush1.msra.mxu0 0.0
    %1226 = vmatprep.subr.mxu0 0.0
    %1227 = vmatpush1.msra.mxu0 0.0
    %1228 = vmatprep.subr.mxu0 0.0
    %1229 = vmatpush1.msra.mxu0 0.0
    %1230 = vmatprep.subr.mxu0 0.0
    %1231 = vmatpush1.msra.mxu0 0.0
    %1232 = vmatprep.subr.mxu0 0.0
    %1233 = vmatpush1.msra.mxu0 0.0
    %1234 = vmatprep.subr.mxu0 0.0
    %1235 = vmatpush1.msra.mxu0 0.0
    %1236 = vmatprep.subr.mxu0 0.0
    %1237 = vmatpush1.msra.mxu0 0.0
    %1238 = vmatprep.subr.mxu0 0.0
    %1239 = vmatpush1.msra.mxu0 0.0
    %1240 = vmatprep.subr.mxu0 0.0
    %1241 = vmatpush1.msra.mxu0 0.0
    %1242 = vmatprep.subr.mxu0 0.0
    %1243 = vmatpush1.msra.mxu0 0.0
    %1244 = vmatprep.subr.mxu0 0.0
    %1245 = vmatpush1.msra.mxu0 0.0
    %1246 = vmatprep.subr.mxu0 0.0
    %1247 = vmatpush1.msra.mxu0 0.0
    %1248 = vmatprep.subr.mxu0 0.0
    %1249 = vmatpush1.msra.mxu0 0.0
    %1250 = vmatprep.subr.mxu0 0.0
    %1251 = vmatpush1.msra.mxu0 0.0
    %1252 = vmatprep.subr.mxu0 0.0
    %1253 = vmatpush1.msra.mxu0 0.0
    %1254 = vmatprep.subr.mxu0 0.0
    %1255 = vmatpush1.msra.mxu0 0.0
    %1256 = vmatprep.subr.mxu0 0.0
    %1257 = vmatpush1.msra.mxu0 0.0
    %1258 = vmatprep.subr.mxu0 0.0
    %1259 = vmatpush1.msra.mxu0 0.0
    %1260 = vmatprep.subr.mxu0 0.0
    %1261 = vmatpush1.msra.mxu0 0.0
    %1262 = vmatprep.subr.mxu0 0.0
    %1263 = vmatpush1.msra.mxu0 0.0
    %1264 = vmatprep.subr.mxu0 0.0
    %1265 = vmatpush1.msra.mxu0 0.0
    %1266 = vmatprep.subr.mxu0 0.0
    %1267 = vmatpush1.msra.mxu0 0.0
    %1268 = vmatprep.subr.mxu0 0.0
    %1269 = vmatpush1.msra.mxu0 0.0
    %1270 = vmatprep.subr.mxu0 0.0
    %1271 = vmatpush1.msra.mxu0 0.0
    %1272 = vmatprep.subr.mxu0 0.0
    %1273 = vmatpush1.msra.mxu0 0.0
    %1274 = vmatprep.subr.mxu0 0.0
    %1275 = vmatpush1.msra.mxu0 0.0
    %1276 = vmatprep.subr.mxu0 0.0
    %1277 = vmatpush1.msra.mxu0 0.0
    %1278 = vmatprep.subr.mxu0 0.0
    %1279 = vmatpush1.msra.mxu0 0.0
    %1280 = vmatprep.mubr.f32.mxu0 0.0
    %1281 = vmatmul.mubr.f32.gmra.mrb[0].mxu0 %v1214
    %v1282 = vpop.f32.mrb[0].mxu0
    %v1283 = vadd.f32 0.0, %v1282
    %v1284 = vpop.f32.mrb[0].mxu0
    %1285 = vdwg.mxu0
    %v1286 = vadd.f32 %v1213, %v1283
    %v1287 = vxor.u32 %v1286, 2147483648
    %v1288 = vmul.f32 %v1287, 1.442695
    %v1289 = vpow.pop %v1288
    %v1290 = vadd.f32 %v1289, 1.0
    %v1291 = vrcp.pop %v1290
    %v1292 = vmul.f32 1.0, %v1291
    %v1293 = vtanh.pop %v1286
    %v1294 = vmul.f32 %v1292, %v1201
    %1296 = vrot.lane.b32.xlu0 %v1293, 64
    %v1297 = vpop.permute.xlu0 %1296
    %v1299 = vmul.f32 %v1292, %v1297
    %1301 = vrot.lane.b32.xlu0 %v1299, 32
    %v1302 = vpop.permute.xlu0 %1301
    %v1304 = vadd.f32 %v1294, %v1302
    %v1305 = vtanh.pop %v1304
    %1307 = vrot.lane.b32.xlu0 %v1305, 64
    %v1308 = vpop.permute.xlu0 %1307
    %v1310 = vmul.f32 %v1292, %v1308
    %1312 = vrot.lane.b32.xlu0 %v1310, 32
    %v1313 = vpop.permute.xlu0 %1312
    %1315 = vst.msk [vmem:[#allocation2 + $0x2] sm:$0x3] %vm289, %v1313
    %v1316 = vld [vmem:[#allocation3 + $0x4] sm:$0x3]
    %v1317 = vsel %vm186, %v1313, 0
    %1319 = vmatprep.subr.mxu0 0.0
    %1320 = vmatpush1.msra.mxu0 %v1016
    %1321 = vmatprep.subr.mxu0 0.0
    %1322 = vmatpush1.msra.mxu0 %v1017
    %1323 = vmatprep.subr.mxu0 0.0
    %1324 = vmatpush1.msra.mxu0 %v1018
    %1325 = vmatprep.subr.mxu0 0.0
    %1326 = vmatpush1.msra.mxu0 %v1019
    %1327 = vmatprep.subr.mxu0 0.0
    %1328 = vmatpush1.msra.mxu0 0.0
    %1329 = vmatprep.subr.mxu0 0.0
    %1330 = vmatpush1.msra.mxu0 0.0
    %1331 = vmatprep.subr.mxu0 0.0
    %1332 = vmatpush1.msra.mxu0 0.0
    %1333 = vmatprep.subr.mxu0 0.0
    %1334 = vmatpush1.msra.mxu0 0.0
    %1335 = vmatprep.subr.mxu0 0.0
    %1336 = vmatpush1.msra.mxu0 0.0
    %1337 = vmatprep.subr.mxu0 0.0
    %1338 = vmatpush1.msra.mxu0 0.0
    %1339 = vmatprep.subr.mxu0 0.0
    %1340 = vmatpush1.msra.mxu0 0.0
    %1341 = vmatprep.subr.mxu0 0.0
    %1342 = vmatpush1.msra.mxu0 0.0
    %1343 = vmatprep.subr.mxu0 0.0
    %1344 = vmatpush1.msra.mxu0 0.0
    %1345 = vmatprep.subr.mxu0 0.0
    %1346 = vmatpush1.msra.mxu0 0.0
    %1347 = vmatprep.subr.mxu0 0.0
    %1348 = vmatpush1.msra.mxu0 0.0
    %1349 = vmatprep.subr.mxu0 0.0
    %1350 = vmatpush1.msra.mxu0 0.0
    %1351 = vmatprep.subr.mxu0 0.0
    %1352 = vmatpush1.msra.mxu0 0.0
    %1353 = vmatprep.subr.mxu0 0.0
    %1354 = vmatpush1.msra.mxu0 0.0
    %1355 = vmatprep.subr.mxu0 0.0
    %1356 = vmatpush1.msra.mxu0 0.0
    %1357 = vmatprep.subr.mxu0 0.0
    %1358 = vmatpush1.msra.mxu0 0.0
    %1359 = vmatprep.subr.mxu0 0.0
    %1360 = vmatpush1.msra.mxu0 0.0
    %1361 = vmatprep.subr.mxu0 0.0
    %1362 = vmatpush1.msra.mxu0 0.0
    %1363 = vmatprep.subr.mxu0 0.0
    %1364 = vmatpush1.msra.mxu0 0.0
    %1365 = vmatprep.subr.mxu0 0.0
    %1366 = vmatpush1.msra.mxu0 0.0
    %1367 = vmatprep.subr.mxu0 0.0
    %1368 = vmatpush1.msra.mxu0 0.0
    %1369 = vmatprep.subr.mxu0 0.0
    %1370 = vmatpush1.msra.mxu0 0.0
    %1371 = vmatprep.subr.mxu0 0.0
    %1372 = vmatpush1.msra.mxu0 0.0
    %1373 = vmatprep.subr.mxu0 0.0
    %1374 = vmatpush1.msra.mxu0 0.0
    %1375 = vmatprep.subr.mxu0 0.0
    %1376 = vmatpush1.msra.mxu0 0.0
    %1377 = vmatprep.subr.mxu0 0.0
    %1378 = vmatpush1.msra.mxu0 0.0
    %1379 = vmatprep.subr.mxu0 0.0
    %1380 = vmatpush1.msra.mxu0 0.0
    %1381 = vmatprep.subr.mxu0 0.0
    %1382 = vmatpush1.msra.mxu0 0.0
    %1383 = vmatprep.mubr.f32.mxu0 0.0
    %1384 = vmatmul.mubr.f32.gmra.mrb[0].mxu0 %v1317
    %v1385 = vpop.f32.mrb[0].mxu0
    %v1386 = vadd.f32 0.0, %v1385
    %v1387 = vpop.f32.mrb[0].mxu0
    %1388 = vdwg.mxu0
    %v1389 = vadd.f32 %v1316, %v1386
    %v1390 = vxor.u32 %v1389, 2147483648
    %v1391 = vmul.f32 %v1390, 1.442695
    %v1392 = vpow.pop %v1391
    %v1393 = vadd.f32 %v1392, 1.0
    %v1394 = vrcp.pop %v1393
    %v1395 = vmul.f32 1.0, %v1394
    %v1396 = vtanh.pop %v1389
    %v1397 = vmul.f32 %v1395, %v1304
    %1399 = vrot.lane.b32.xlu0 %v1396, 64
    %v1400 = vpop.permute.xlu0 %1399
    %v1402 = vmul.f32 %v1395, %v1400
    %1404 = vrot.lane.b32.xlu0 %v1402, 32
    %v1405 = vpop.permute.xlu0 %1404
    %v1407 = vadd.f32 %v1397, %v1405
    %v1408 = vtanh.pop %v1407
    %1410 = vrot.lane.b32.xlu0 %v1408, 64
    %v1411 = vpop.permute.xlu0 %1410
    %v1413 = vmul.f32 %v1395, %v1411
    %1415 = vrot.lane.b32.xlu0 %v1413, 32
    %v1416 = vpop.permute.xlu0 %1415
    %1418 = vst.msk [vmem:[#allocation2 + $0x4] sm:$0x3] %vm289, %v1416
    %v1419 = vld [vmem:[#allocation3 + $0x6] sm:$0x3]
    %v1420 = vsel %vm186, %v1416, 0
    %1422 = vmatprep.subr.mxu0 0.0
    %1423 = vmatpush1.msra.mxu0 %v1016
    %1424 = vmatprep.subr.mxu0 0.0
    %1425 = vmatpush1.msra.mxu0 %v1017
    %1426 = vmatprep.subr.mxu0 0.0
    %1427 = vmatpush1.msra.mxu0 %v1018
    %1428 = vmatprep.subr.mxu0 0.0
    %1429 = vmatpush1.msra.mxu0 %v1019
    %1430 = vmatprep.subr.mxu0 0.0
    %1431 = vmatpush1.msra.mxu0 0.0
    %1432 = vmatprep.subr.mxu0 0.0
    %1433 = vmatpush1.msra.mxu0 0.0
    %1434 = vmatprep.subr.mxu0 0.0
    %1435 = vmatpush1.msra.mxu0 0.0
    %1436 = vmatprep.subr.mxu0 0.0
    %1437 = vmatpush1.msra.mxu0 0.0
    %1438 = vmatprep.subr.mxu0 0.0
    %1439 = vmatpush1.msra.mxu0 0.0
    %1440 = vmatprep.subr.mxu0 0.0
    %1441 = vmatpush1.msra.mxu0 0.0
    %1442 = vmatprep.subr.mxu0 0.0
    %1443 = vmatpush1.msra.mxu0 0.0
    %1444 = vmatprep.subr.mxu0 0.0
    %1445 = vmatpush1.msra.mxu0 0.0
    %1446 = vmatprep.subr.mxu0 0.0
    %1447 = vmatpush1.msra.mxu0 0.0
    %1448 = vmatprep.subr.mxu0 0.0
    %1449 = vmatpush1.msra.mxu0 0.0
    %1450 = vmatprep.subr.mxu0 0.0
    %1451 = vmatpush1.msra.mxu0 0.0
    %1452 = vmatprep.subr.mxu0 0.0
    %1453 = vmatpush1.msra.mxu0 0.0
    %1454 = vmatprep.subr.mxu0 0.0
    %1455 = vmatpush1.msra.mxu0 0.0
    %1456 = vmatprep.subr.mxu0 0.0
    %1457 = vmatpush1.msra.mxu0 0.0
    %1458 = vmatprep.subr.mxu0 0.0
    %1459 = vmatpush1.msra.mxu0 0.0
    %1460 = vmatprep.subr.mxu0 0.0
    %1461 = vmatpush1.msra.mxu0 0.0
    %1462 = vmatprep.subr.mxu0 0.0
    %1463 = vmatpush1.msra.mxu0 0.0
    %1464 = vmatprep.subr.mxu0 0.0
    %1465 = vmatpush1.msra.mxu0 0.0
    %1466 = vmatprep.subr.mxu0 0.0
    %1467 = vmatpush1.msra.mxu0 0.0
    %1468 = vmatprep.subr.mxu0 0.0
    %1469 = vmatpush1.msra.mxu0 0.0
    %1470 = vmatprep.subr.mxu0 0.0
    %1471 = vmatpush1.msra.mxu0 0.0
    %1472 = vmatprep.subr.mxu0 0.0
    %1473 = vmatpush1.msra.mxu0 0.0
    %1474 = vmatprep.subr.mxu0 0.0
    %1475 = vmatpush1.msra.mxu0 0.0
    %1476 = vmatprep.subr.mxu0 0.0
    %1477 = vmatpush1.msra.mxu0 0.0
    %1478 = vmatprep.subr.mxu0 0.0
    %1479 = vmatpush1.msra.mxu0 0.0
    %1480 = vmatprep.subr.mxu0 0.0
    %1481 = vmatpush1.msra.mxu0 0.0
    %1482 = vmatprep.subr.mxu0 0.0
    %1483 = vmatpush1.msra.mxu0 0.0
    %1484 = vmatprep.subr.mxu0 0.0
    %1485 = vmatpush1.msra.mxu0 0.0
    %1486 = vmatprep.mubr.f32.mxu0 0.0
    %1487 = vmatmul.mubr.f32.gmra.mrb[0].mxu0 %v1420
    %v1488 = vpop.f32.mrb[0].mxu0
    %v1489 = vadd.f32 0.0, %v1488
    %v1490 = vpop.f32.mrb[0].mxu0
    %1491 = vdwg.mxu0
    %v1492 = vadd.f32 %v1419, %v1489
    %v1493 = vxor.u32 %v1492, 2147483648
    %v1494 = vmul.f32 %v1493, 1.442695
    %v1495 = vpow.pop %v1494
    %v1496 = vadd.f32 %v1495, 1.0
    %v1497 = vrcp.pop %v1496
    %v1498 = vmul.f32 1.0, %v1497
    %v1499 = vtanh.pop %v1492
    %v1500 = vmul.f32 %v1498, %v1407
    %1502 = vrot.lane.b32.xlu0 %v1499, 64
    %v1503 = vpop.permute.xlu0 %1502
    %v1505 = vmul.f32 %v1498, %v1503
    %1507 = vrot.lane.b32.xlu0 %v1505, 32
    %v1508 = vpop.permute.xlu0 %1507
    %v1510 = vadd.f32 %v1500, %v1508
    %v1511 = vtanh.pop %v1510
    %1513 = vrot.lane.b32.xlu0 %v1511, 64
    %v1514 = vpop.permute.xlu0 %1513
    %v1516 = vmul.f32 %v1498, %v1514
    %1518 = vrot.lane.b32.xlu0 %v1516, 32
    %v1519 = vpop.permute.xlu0 %1518
    %1521 = vst.msk [vmem:[#allocation2 + $0x6] sm:$0x3] %vm289, %v1519
    %v1522 = vld [vmem:[#allocation3 + $0x8] sm:$0x3]
    %v1523 = vsel %vm186, %v1519, 0
    %1525 = vmatprep.subr.mxu0 0.0
    %1526 = vmatpush1.msra.mxu0 %v1016
    %1527 = vmatprep.subr.mxu0 0.0
    %1528 = vmatpush1.msra.mxu0 %v1017
    %1529 = vmatprep.subr.mxu0 0.0
    %1530 = vmatpush1.msra.mxu0 %v1018
    %1531 = vmatprep.subr.mxu0 0.0
    %1532 = vmatpush1.msra.mxu0 %v1019
    %1533 = vmatprep.subr.mxu0 0.0
    %1534 = vmatpush1.msra.mxu0 0.0
    %1535 = vmatprep.subr.mxu0 0.0
    %1536 = vmatpush1.msra.mxu0 0.0
    %1537 = vmatprep.subr.mxu0 0.0
    %1538 = vmatpush1.msra.mxu0 0.0
    %1539 = vmatprep.subr.mxu0 0.0
    %1540 = vmatpush1.msra.mxu0 0.0
    %1541 = vmatprep.subr.mxu0 0.0
    %1542 = vmatpush1.msra.mxu0 0.0
    %1543 = vmatprep.subr.mxu0 0.0
    %1544 = vmatpush1.msra.mxu0 0.0
    %1545 = vmatprep.subr.mxu0 0.0
    %1546 = vmatpush1.msra.mxu0 0.0
    %1547 = vmatprep.subr.mxu0 0.0
    %1548 = vmatpush1.msra.mxu0 0.0
    %1549 = vmatprep.subr.mxu0 0.0
    %1550 = vmatpush1.msra.mxu0 0.0
    %1551 = vmatprep.subr.mxu0 0.0
    %1552 = vmatpush1.msra.mxu0 0.0
    %1553 = vmatprep.subr.mxu0 0.0
    %1554 = vmatpush1.msra.mxu0 0.0
    %1555 = vmatprep.subr.mxu0 0.0
    %1556 = vmatpush1.msra.mxu0 0.0
    %1557 = vmatprep.subr.mxu0 0.0
    %1558 = vmatpush1.msra.mxu0 0.0
    %1559 = vmatprep.subr.mxu0 0.0
    %1560 = vmatpush1.msra.mxu0 0.0
    %1561 = vmatprep.subr.mxu0 0.0
    %1562 = vmatpush1.msra.mxu0 0.0
    %1563 = vmatprep.subr.mxu0 0.0
    %1564 = vmatpush1.msra.mxu0 0.0
    %1565 = vmatprep.subr.mxu0 0.0
    %1566 = vmatpush1.msra.mxu0 0.0
    %1567 = vmatprep.subr.mxu0 0.0
    %1568 = vmatpush1.msra.mxu0 0.0
    %1569 = vmatprep.subr.mxu0 0.0
    %1570 = vmatpush1.msra.mxu0 0.0
    %1571 = vmatprep.subr.mxu0 0.0
    %1572 = vmatpush1.msra.mxu0 0.0
    %1573 = vmatprep.subr.mxu0 0.0
    %1574 = vmatpush1.msra.mxu0 0.0
    %1575 = vmatprep.subr.mxu0 0.0
    %1576 = vmatpush1.msra.mxu0 0.0
    %1577 = vmatprep.subr.mxu0 0.0
    %1578 = vmatpush1.msra.mxu0 0.0
    %1579 = vmatprep.subr.mxu0 0.0
    %1580 = vmatpush1.msra.mxu0 0.0
    %1581 = vmatprep.subr.mxu0 0.0
    %1582 = vmatpush1.msra.mxu0 0.0
    %1583 = vmatprep.subr.mxu0 0.0
    %1584 = vmatpush1.msra.mxu0 0.0
    %1585 = vmatprep.subr.mxu0 0.0
    %1586 = vmatpush1.msra.mxu0 0.0
    %1587 = vmatprep.subr.mxu0 0.0
    %1588 = vmatpush1.msra.mxu0 0.0
    %1589 = vmatprep.mubr.f32.mxu0 0.0
    %1590 = vmatmul.mubr.f32.gmra.mrb[0].mxu0 %v1523
    %v1591 = vpop.f32.mrb[0].mxu0
    %v1592 = vadd.f32 0.0, %v1591
    %v1593 = vpop.f32.mrb[0].mxu0
    %1594 = vdwg.mxu0
    %v1595 = vadd.f32 %v1522, %v1592
    %v1596 = vxor.u32 %v1595, 2147483648
    %v1597 = vmul.f32 %v1596, 1.442695
    %v1598 = vpow.pop %v1597
    %v1599 = vadd.f32 %v1598, 1.0
    %v1600 = vrcp.pop %v1599
    %v1601 = vmul.f32 1.0, %v1600
    %v1602 = vtanh.pop %v1595
    %v1603 = vmul.f32 %v1601, %v1510
    %1605 = vrot.lane.b32.xlu0 %v1602, 64
    %v1606 = vpop.permute.xlu0 %1605
    %v1608 = vmul.f32 %v1601, %v1606
    %1610 = vrot.lane.b32.xlu0 %v1608, 32
    %v1611 = vpop.permute.xlu0 %1610
    %v1613 = vadd.f32 %v1603, %v1611
    %v1614 = vtanh.pop %v1613
    %1616 = vrot.lane.b32.xlu0 %v1614, 64
    %v1617 = vpop.permute.xlu0 %1616
    %v1619 = vmul.f32 %v1601, %v1617
    %1621 = vrot.lane.b32.xlu0 %v1619, 32
    %v1622 = vpop.permute.xlu0 %1621
    %1624 = vst.msk [vmem:[#allocation2 + $0x8] sm:$0x3] %vm289, %v1622
    %v1625 = vld [vmem:[#allocation3 + $0xa] sm:$0x3]
    %v1626 = vsel %vm186, %v1622, 0
    %1628 = vmatprep.subr.mxu0 0.0
    %1629 = vmatpush1.msra.mxu0 %v1016
    %1630 = vmatprep.subr.mxu0 0.0
    %1631 = vmatpush1.msra.mxu0 %v1017
    %1632 = vmatprep.subr.mxu0 0.0
    %1633 = vmatpush1.msra.mxu0 %v1018
    %1634 = vmatprep.subr.mxu0 0.0
    %1635 = vmatpush1.msra.mxu0 %v1019
    %1636 = vmatprep.subr.mxu0 0.0
    %1637 = vmatpush1.msra.mxu0 0.0
    %1638 = vmatprep.subr.mxu0 0.0
    %1639 = vmatpush1.msra.mxu0 0.0
    %1640 = vmatprep.subr.mxu0 0.0
    %1641 = vmatpush1.msra.mxu0 0.0
    %1642 = vmatprep.subr.mxu0 0.0
    %1643 = vmatpush1.msra.mxu0 0.0
    %1644 = vmatprep.subr.mxu0 0.0
    %1645 = vmatpush1.msra.mxu0 0.0
    %1646 = vmatprep.subr.mxu0 0.0
    %1647 = vmatpush1.msra.mxu0 0.0
    %1648 = vmatprep.subr.mxu0 0.0
    %1649 = vmatpush1.msra.mxu0 0.0
    %1650 = vmatprep.subr.mxu0 0.0
    %1651 = vmatpush1.msra.mxu0 0.0
    %1652 = vmatprep.subr.mxu0 0.0
    %1653 = vmatpush1.msra.mxu0 0.0
    %1654 = vmatprep.subr.mxu0 0.0
    %1655 = vmatpush1.msra.mxu0 0.0
    %1656 = vmatprep.subr.mxu0 0.0
    %1657 = vmatpush1.msra.mxu0 0.0
    %1658 = vmatprep.subr.mxu0 0.0
    %1659 = vmatpush1.msra.mxu0 0.0
    %1660 = vmatprep.subr.mxu0 0.0
    %1661 = vmatpush1.msra.mxu0 0.0
    %1662 = vmatprep.subr.mxu0 0.0
    %1663 = vmatpush1.msra.mxu0 0.0
    %1664 = vmatprep.subr.mxu0 0.0
    %1665 = vmatpush1.msra.mxu0 0.0
    %1666 = vmatprep.subr.mxu0 0.0
    %1667 = vmatpush1.msra.mxu0 0.0
    %1668 = vmatprep.subr.mxu0 0.0
    %1669 = vmatpush1.msra.mxu0 0.0
    %1670 = vmatprep.subr.mxu0 0.0
    %1671 = vmatpush1.msra.mxu0 0.0
    %1672 = vmatprep.subr.mxu0 0.0
    %1673 = vmatpush1.msra.mxu0 0.0
    %1674 = vmatprep.subr.mxu0 0.0
    %1675 = vmatpush1.msra.mxu0 0.0
    %1676 = vmatprep.subr.mxu0 0.0
    %1677 = vmatpush1.msra.mxu0 0.0
    %1678 = vmatprep.subr.mxu0 0.0
    %1679 = vmatpush1.msra.mxu0 0.0
    %1680 = vmatprep.subr.mxu0 0.0
    %1681 = vmatpush1.msra.mxu0 0.0
    %1682 = vmatprep.subr.mxu0 0.0
    %1683 = vmatpush1.msra.mxu0 0.0
    %1684 = vmatprep.subr.mxu0 0.0
    %1685 = vmatpush1.msra.mxu0 0.0
    %1686 = vmatprep.subr.mxu0 0.0
    %1687 = vmatpush1.msra.mxu0 0.0
    %1688 = vmatprep.subr.mxu0 0.0
    %1689 = vmatpush1.msra.mxu0 0.0
    %1690 = vmatprep.subr.mxu0 0.0
    %1691 = vmatpush1.msra.mxu0 0.0
    %1692 = vmatprep.mubr.f32.mxu0 0.0
    %1693 = vmatmul.mubr.f32.gmra.mrb[0].mxu0 %v1626
    %v1694 = vpop.f32.mrb[0].mxu0
    %v1695 = vadd.f32 0.0, %v1694
    %v1696 = vpop.f32.mrb[0].mxu0
    %1697 = vdwg.mxu0
    %v1698 = vadd.f32 %v1625, %v1695
    %v1699 = vxor.u32 %v1698, 2147483648
    %v1700 = vmul.f32 %v1699, 1.442695
    %v1701 = vpow.pop %v1700
    %v1702 = vadd.f32 %v1701, 1.0
    %v1703 = vrcp.pop %v1702
    %v1704 = vmul.f32 1.0, %v1703
    %v1705 = vtanh.pop %v1698
    %v1706 = vmul.f32 %v1704, %v1613
    %1708 = vrot.lane.b32.xlu0 %v1705, 64
    %v1709 = vpop.permute.xlu0 %1708
    %v1711 = vmul.f32 %v1704, %v1709
    %1713 = vrot.lane.b32.xlu0 %v1711, 32
    %v1714 = vpop.permute.xlu0 %1713
    %v1716 = vadd.f32 %v1706, %v1714
    %v1717 = vtanh.pop %v1716
    %1719 = vrot.lane.b32.xlu0 %v1717, 64
    %v1720 = vpop.permute.xlu0 %1719
    %v1722 = vmul.f32 %v1704, %v1720
    %1724 = vrot.lane.b32.xlu0 %v1722, 32
    %v1725 = vpop.permute.xlu0 %1724
    %1727 = vst.msk [vmem:[#allocation2 + $0xa] sm:$0x3] %vm289, %v1725
    %v1728 = vld [vmem:[#allocation3 + $0xc] sm:$0x3]
    %v1729 = vsel %vm186, %v1725, 0
    %1731 = vmatprep.subr.mxu0 0.0
    %1732 = vmatpush1.msra.mxu0 %v1016
    %1733 = vmatprep.subr.mxu0 0.0
    %1734 = vmatpush1.msra.mxu0 %v1017
    %1735 = vmatprep.subr.mxu0 0.0
    %1736 = vmatpush1.msra.mxu0 %v1018
    %1737 = vmatprep.subr.mxu0 0.0
    %1738 = vmatpush1.msra.mxu0 %v1019
    %1739 = vmatprep.subr.mxu0 0.0
    %1740 = vmatpush1.msra.mxu0 0.0
    %1741 = vmatprep.subr.mxu0 0.0
    %1742 = vmatpush1.msra.mxu0 0.0
    %1743 = vmatprep.subr.mxu0 0.0
    %1744 = vmatpush1.msra.mxu0 0.0
    %1745 = vmatprep.subr.mxu0 0.0
    %1746 = vmatpush1.msra.mxu0 0.0
    %1747 = vmatprep.subr.mxu0 0.0
    %1748 = vmatpush1.msra.mxu0 0.0
    %1749 = vmatprep.subr.mxu0 0.0
    %1750 = vmatpush1.msra.mxu0 0.0
    %1751 = vmatprep.subr.mxu0 0.0
    %1752 = vmatpush1.msra.mxu0 0.0
    %1753 = vmatprep.subr.mxu0 0.0
    %1754 = vmatpush1.msra.mxu0 0.0
    %1755 = vmatprep.subr.mxu0 0.0
    %1756 = vmatpush1.msra.mxu0 0.0
    %1757 = vmatprep.subr.mxu0 0.0
    %1758 = vmatpush1.msra.mxu0 0.0
    %1759 = vmatprep.subr.mxu0 0.0
    %1760 = vmatpush1.msra.mxu0 0.0
    %1761 = vmatprep.subr.mxu0 0.0
    %1762 = vmatpush1.msra.mxu0 0.0
    %1763 = vmatprep.subr.mxu0 0.0
    %1764 = vmatpush1.msra.mxu0 0.0
    %1765 = vmatprep.subr.mxu0 0.0
    %1766 = vmatpush1.msra.mxu0 0.0
    %1767 = vmatprep.subr.mxu0 0.0
    %1768 = vmatpush1.msra.mxu0 0.0
    %1769 = vmatprep.subr.mxu0 0.0
    %1770 = vmatpush1.msra.mxu0 0.0
    %1771 = vmatprep.subr.mxu0 0.0
    %1772 = vmatpush1.msra.mxu0 0.0
    %1773 = vmatprep.subr.mxu0 0.0
    %1774 = vmatpush1.msra.mxu0 0.0
    %1775 = vmatprep.subr.mxu0 0.0
    %1776 = vmatpush1.msra.mxu0 0.0
    %1777 = vmatprep.subr.mxu0 0.0
    %1778 = vmatpush1.msra.mxu0 0.0
    %1779 = vmatprep.subr.mxu0 0.0
    %1780 = vmatpush1.msra.mxu0 0.0
    %1781 = vmatprep.subr.mxu0 0.0
    %1782 = vmatpush1.msra.mxu0 0.0
    %1783 = vmatprep.subr.mxu0 0.0
    %1784 = vmatpush1.msra.mxu0 0.0
    %1785 = vmatprep.subr.mxu0 0.0
    %1786 = vmatpush1.msra.mxu0 0.0
    %1787 = vmatprep.subr.mxu0 0.0
    %1788 = vmatpush1.msra.mxu0 0.0
    %1789 = vmatprep.subr.mxu0 0.0
    %1790 = vmatpush1.msra.mxu0 0.0
    %1791 = vmatprep.subr.mxu0 0.0
    %1792 = vmatpush1.msra.mxu0 0.0
    %1793 = vmatprep.subr.mxu0 0.0
    %1794 = vmatpush1.msra.mxu0 0.0
    %1795 = vmatprep.mubr.f32.mxu0 0.0
    %1796 = vmatmul.mubr.f32.gmra.mrb[0].mxu0 %v1729
    %v1797 = vpop.f32.mrb[0].mxu0
    %v1798 = vadd.f32 0.0, %v1797
    %v1799 = vpop.f32.mrb[0].mxu0
    %1800 = vdwg.mxu0
    %v1801 = vadd.f32 %v1728, %v1798
    %v1802 = vxor.u32 %v1801, 2147483648
    %v1803 = vmul.f32 %v1802, 1.442695
    %v1804 = vpow.pop %v1803
    %v1805 = vadd.f32 %v1804, 1.0
    %v1806 = vrcp.pop %v1805
    %v1807 = vmul.f32 1.0, %v1806
    %v1808 = vtanh.pop %v1801
    %v1809 = vmul.f32 %v1807, %v1716
    %1811 = vrot.lane.b32.xlu0 %v1808, 64
    %v1812 = vpop.permute.xlu0 %1811
    %v1814 = vmul.f32 %v1807, %v1812
    %1816 = vrot.lane.b32.xlu0 %v1814, 32
    %v1817 = vpop.permute.xlu0 %1816
    %v1819 = vadd.f32 %v1809, %v1817
    %v1820 = vtanh.pop %v1819
    %1822 = vrot.lane.b32.xlu0 %v1820, 64
    %v1823 = vpop.permute.xlu0 %1822
    %v1825 = vmul.f32 %v1807, %v1823
    %1827 = vrot.lane.b32.xlu0 %v1825, 32
    %v1828 = vpop.permute.xlu0 %1827
    %1830 = vst.msk [vmem:[#allocation2 + $0xc] sm:$0x3] %vm289, %v1828
    %v1831 = vld [vmem:[#allocation3 + $0xe] sm:$0x3]
    %v1832 = vsel %vm186, %v1828, 0
    %1834 = vmatprep.subr.mxu0 0.0
    %1835 = vmatpush1.msra.mxu0 %v1016
    %1836 = vmatprep.subr.mxu0 0.0
    %1837 = vmatpush1.msra.mxu0 %v1017
    %1838 = vmatprep.subr.mxu0 0.0
    %1839 = vmatpush1.msra.mxu0 %v1018
    %1840 = vmatprep.subr.mxu0 0.0
    %1841 = vmatpush1.msra.mxu0 %v1019
    %1842 = vmatprep.subr.mxu0 0.0
    %1843 = vmatpush1.msra.mxu0 0.0
    %1844 = vmatprep.subr.mxu0 0.0
    %1845 = vmatpush1.msra.mxu0 0.0
    %1846 = vmatprep.subr.mxu0 0.0
    %1847 = vmatpush1.msra.mxu0 0.0
    %1848 = vmatprep.subr.mxu0 0.0
    %1849 = vmatpush1.msra.mxu0 0.0
    %1850 = vmatprep.subr.mxu0 0.0
    %1851 = vmatpush1.msra.mxu0 0.0
    %1852 = vmatprep.subr.mxu0 0.0
    %1853 = vmatpush1.msra.mxu0 0.0
    %1854 = vmatprep.subr.mxu0 0.0
    %1855 = vmatpush1.msra.mxu0 0.0
    %1856 = vmatprep.subr.mxu0 0.0
    %1857 = vmatpush1.msra.mxu0 0.0
    %1858 = vmatprep.subr.mxu0 0.0
    %1859 = vmatpush1.msra.mxu0 0.0
    %1860 = vmatprep.subr.mxu0 0.0
    %1861 = vmatpush1.msra.mxu0 0.0
    %1862 = vmatprep.subr.mxu0 0.0
    %1863 = vmatpush1.msra.mxu0 0.0
    %1864 = vmatprep.subr.mxu0 0.0
    %1865 = vmatpush1.msra.mxu0 0.0
    %1866 = vmatprep.subr.mxu0 0.0
    %1867 = vmatpush1.msra.mxu0 0.0
    %1868 = vmatprep.subr.mxu0 0.0
    %1869 = vmatpush1.msra.mxu0 0.0
    %1870 = vmatprep.subr.mxu0 0.0
    %1871 = vmatpush1.msra.mxu0 0.0
    %1872 = vmatprep.subr.mxu0 0.0
    %1873 = vmatpush1.msra.mxu0 0.0
    %1874 = vmatprep.subr.mxu0 0.0
    %1875 = vmatpush1.msra.mxu0 0.0
    %1876 = vmatprep.subr.mxu0 0.0
    %1877 = vmatpush1.msra.mxu0 0.0
    %1878 = vmatprep.subr.mxu0 0.0
    %1879 = vmatpush1.msra.mxu0 0.0
    %1880 = vmatprep.subr.mxu0 0.0
    %1881 = vmatpush1.msra.mxu0 0.0
    %1882 = vmatprep.subr.mxu0 0.0
    %1883 = vmatpush1.msra.mxu0 0.0
    %1884 = vmatprep.subr.mxu0 0.0
    %1885 = vmatpush1.msra.mxu0 0.0
    %1886 = vmatprep.subr.mxu0 0.0
    %1887 = vmatpush1.msra.mxu0 0.0
    %1888 = vmatprep.subr.mxu0 0.0
    %1889 = vmatpush1.msra.mxu0 0.0
    %1890 = vmatprep.subr.mxu0 0.0
    %1891 = vmatpush1.msra.mxu0 0.0
    %1892 = vmatprep.subr.mxu0 0.0
    %1893 = vmatpush1.msra.mxu0 0.0
    %1894 = vmatprep.subr.mxu0 0.0
    %1895 = vmatpush1.msra.mxu0 0.0
    %1896 = vmatprep.subr.mxu0 0.0
    %1897 = vmatpush1.msra.mxu0 0.0
    %1898 = vmatprep.mubr.f32.mxu0 0.0
    %1899 = vmatmul.mubr.f32.gmra.mrb[0].mxu0 %v1832
    %v1900 = vpop.f32.mrb[0].mxu0
    %v1901 = vadd.f32 0.0, %v1900
    %v1902 = vpop.f32.mrb[0].mxu0
    %1903 = vdwg.mxu0
    %v1904 = vadd.f32 %v1831, %v1901
    %v1905 = vxor.u32 %v1904, 2147483648
    %v1906 = vmul.f32 %v1905, 1.442695
    %v1907 = vpow.pop %v1906
    %v1908 = vadd.f32 %v1907, 1.0
    %v1909 = vrcp.pop %v1908
    %v1910 = vmul.f32 1.0, %v1909
    %v1911 = vtanh.pop %v1904
    %v1912 = vmul.f32 %v1910, %v1819
    %1914 = vrot.lane.b32.xlu0 %v1911, 64
    %v1915 = vpop.permute.xlu0 %1914
    %v1917 = vmul.f32 %v1910, %v1915
    %1919 = vrot.lane.b32.xlu0 %v1917, 32
    %v1920 = vpop.permute.xlu0 %1919
    %v1922 = vadd.f32 %v1912, %v1920
    %v1923 = vtanh.pop %v1922
    %1925 = vrot.lane.b32.xlu0 %v1923, 64
    %v1926 = vpop.permute.xlu0 %1925
    %v1928 = vmul.f32 %v1910, %v1926
    %1930 = vrot.lane.b32.xlu0 %v1928, 32
    %v1931 = vpop.permute.xlu0 %1930
    %1933 = vst.msk [vmem:[#allocation2 + $0xe] sm:$0x3] %vm289, %v1931
    %v1934 = vld [vmem:[#allocation2] sm:$0xff]
    %v1935 = vld [vmem:[#allocation2 + $0x8] sm:$0xff]
    %v1936 = vld [vmem:[#allocation10] sm:$0x1]
    %v1938 = vlaneseq
    %v1939 = vshrl.u32 %v1938, 7
    %v1940 = vsub.s32 0, %v1939
    %v1941 = vrot.slane %v1936, %v1940
    %v1943 = vmul.f32 %v1934, %v1941
    %v1944 = vmul.f32 %v1935, %v1941
    %v1945 = vsel %vm186, %v1943, 0.0
    %1946 = vadd.xlane.f32.xlu0 %v1945
    %v1947 = vpop.xlane.xlu0 %1946
    %v1948 = vsel %vm186, %v1944, 0.0
    %1949 = vadd.xlane.f32.xlu0 %v1948
    %v1950 = vpop.xlane.xlu0 %1949
    %v1951 = vld [vmem:[#allocation4] sm:$0x1]
    %v1953 = vlaneseq
    %v1954 = vshrl.u32 %v1953, 7
    %v1955 = vsub.s32 0, %v1954
    %v1956 = vrot.slane %v1951, %v1955
    %v1958 = vadd.f32 %v1947, %v1956
    %v1959 = vadd.f32 %v1950, %v1956
    %v1960 = vxor.u32 %v1958, 2147483648
    %v1961 = vxor.u32 %v1959, 2147483648
    %v1962 = vmul.f32 %v1960, 1.442695
    %v1963 = vpow.pop %v1962
    %v1964 = vmul.f32 %v1961, 1.442695
    %v1965 = vpow.pop %v1964
    %v1966 = vadd.f32 %v1963, 1.0
    %v1967 = vadd.f32 %v1965, 1.0
    %v1968 = vrcp.pop %v1966
    %v1969 = vmul.f32 1.0, %v1968
    %v1970 = vrcp.pop %v1967
    %v1971 = vmul.f32 1.0, %v1970
    %v1973 = vrot.slane %v1969, 2
    %v1975 = vadd.f32 %v1969, %v1973
    %v1976 = vrot.slane %v1969, 4
    %v1978 = vadd.f32 %v1975, %v1976
    %v1979 = vrot.slane %v1969, 6
    %v1981 = vadd.f32 %v1978, %v1979
    %v1982 = vadd.f32 %v1981, %v1971
    %v1984 = vrot.slane %v1971, 2
    %v1986 = vadd.f32 %v1982, %v1984
    %v1987 = vrot.slane %v1971, 4
    %v1989 = vadd.f32 %v1986, %v1987
    %v1990 = vrot.slane %v1971, 6
    %v1992 = vadd.f32 %v1989, %v1990
    %v1993 = vmul.f32 %v1992, 0.125
    %vm1994 = vcmask 1024
    %1995 = vst.msk [vmem:[%s9] sm:$0x3] %vm1994, %v1993
    // Predicated region
    $region54: #{discriminator_forward.1} parent=1 // pred_check
      _
    $region55: #{discriminator_forward.1} parent=1 // pred_check_branch
      %1997 = sbr.rel (0) target = $region57
    $region56: #{discriminator_forward.1} parent=1 // pred_region
      _
    $region57: #{discriminator_forward.1} parent=1 // pred_fallthru
      _
    // Predicated region
    $region58: #{discriminator_forward.1} parent=1 // pred_check
      _
    $region59: #{discriminator_forward.1} parent=1 // pred_check_branch
      %1999 = sbr.rel (0) target = $region61
    $region60: #{discriminator_forward.1} parent=1 // pred_region
      _
    $region61: #{discriminator_forward.1} parent=1 // pred_fallthru
      _
    %2000 = vsyncpa [#allocation6], 1
    %2001 = vsyncpa [#allocation8], 1
    %2002 = vsyncpa [#allocation11], 1

</llo_original>
